<compile_context>
chip_gen: v6e
topology: v6e:2x2x1
jax: 0.10.0
libtpu: 0.0.40
codegen_flags: <defaults>
</compile_context>

<pallas_src>
import functools

import jax
import jax.numpy as jnp
import numpy as np
from jax import lax
from jax.experimental import pallas as pl
from jax.experimental.pallas import tpu as pltpu


def _physical_vmem_bytes() -> int:
    """Per-core VMEM capacity; conservative fallback if the query fails."""
    try:
        info = pltpu.get_tpu_info()
        return int(getattr(info, "vmem_capacity_bytes", 64 * 1024 * 1024))
    except Exception:
        return 64 * 1024 * 1024  # conservative: v7x per-core VMEM


# ---------------------------------------------------------------------------
# Fused kernel: one grid step = one batch element.
# hw_valid / hw_padded are static Python ints closed over at trace time.
# ---------------------------------------------------------------------------
def _make_kernel(hw_valid: int, hw_padded: int):
    inv_hw = 1.0 / float(hw_valid)
    needs_mask = hw_padded != hw_valid

    def kernel(feat_ref, w1_ref, bnb_ref, wg_ref, bg_ref,
               wfpA_ref, wfpB_ref, bfpw_ref, wfpb_ref, bfpb_ref,
               sa_ref, sb_ref, sbias_ref,
               cond_ref, seg_ref):
        # ---- 1x1 conv (BN scale pre-folded into w1) + shift + ReLU -> bf16
        feat = feat_ref[0]                                            # (Cin, HWp) bf16
        x1_bf = jnp.maximum(
            jnp.dot(w1_ref[...], feat, preferred_element_type=jnp.float32)
            + bnb_ref[...], 0.0).astype(jnp.bfloat16)                 # (C, HWp)

        # ---- guidance_project (1x1 conv with bias) -> cond logits (lane-dense)
        g = jnp.dot(wg_ref[...], x1_bf,
                    preferred_element_type=jnp.float32) + bg_ref[...]  # (K, HWp)
        cond_ref[0] = g.astype(cond_ref.dtype)

        # ---- softmax over the class (sublane) axis; denom via EUP reciprocal
        # TODO(synk): use approx=False if a calibrated probability path consumes this.
        m = jnp.max(g, axis=0, keepdims=True)
        e = jnp.exp(g - m)
        gm = e * pl.reciprocal(jnp.sum(e, axis=0, keepdims=True), approx=True)
        if needs_mask:
            lane = lax.broadcasted_iota(jnp.int32, gm.shape, 1)
            gm = jnp.where(lane < hw_valid, gm, 0.0)   # padded pixels don't feed cf

        # ---- cond_filters: cf[k, c] = (1/HW) * sum_p gm[k, p] * x1[c, p]
        cf = lax.dot_general(gm.astype(jnp.bfloat16), x1_bf,
                             dimension_numbers=(((1,), (1,)), ((), ())),
                             preferred_element_type=jnp.float32) * inv_hw   # (K, C)

        # ---- grouped filter_project + torch.split remap -> dynamic seg weights
        cfA = jnp.dot(sa_ref[...], cf, preferred_element_type=jnp.float32)     # (K, C)
        cfB = jnp.dot(sb_ref[...], cf, preferred_element_type=jnp.float32)     # (K, C)
        cfb = jnp.dot(sbias_ref[...], cf, preferred_element_type=jnp.float32)  # (K, C)
        w_dyn = (jnp.sum(wfpA_ref[...] * cfA[:, None, :], axis=-1)
                 + jnp.sum(wfpB_ref[...] * cfB[:, None, :], axis=-1)
                 + bfpw_ref[...])                                               # (K, C)
        b_dyn = (jnp.sum(wfpb_ref[...] * cfb, axis=-1, keepdims=True)
                 + bfpb_ref[...])                                               # (K, 1)

        # ---- dynamic per-sample segmentation conv (F.conv2d(..., groups=B))
        # NOTE: MXU utilization of the (K,C)@(C,HW) / (C,Cin)@(Cin,HW) matmuls is
        # inherently low (shapes fixed by the model); the kernel is HBM-bound so
        # this is not the binding unit.
        seg = jnp.dot(w_dyn.astype(jnp.bfloat16), x1_bf,
                      preferred_element_type=jnp.float32) + b_dyn               # (K, HWp)
        seg_ref[0] = seg.astype(seg_ref.dtype)

    return kernel


# ---------------------------------------------------------------------------
# Wrapper
# ---------------------------------------------------------------------------
@functools.partial(jax.jit, static_argnames=("out_dtype",))
def cond_head_forward(features, params, out_dtype=jnp.bfloat16):
    B, Cin, H, W = features.shape
    HW = H * W
    HWp = ((HW + 127) // 128) * 128      # lane-dense stores (unmasked vst)
    C = params['w1'].shape[0]            # channel
    K = params['wg'].shape[0]            # num_classes
    Cp1 = C + 1
    eps = 1e-5

    # ---- static bookkeeping for the torch.split remap (pure NumPy, trace-time) ----
    grp_w = (np.arange(K * C) // Cp1).reshape(K, C)      # source group per w_dyn elem
    qa = (np.arange(K) * C) // Cp1                       # first group of each row
    qb = np.minimum(qa + 1, K - 1)                       # second group (if any)
    mB = (grp_w != qa[:, None]).astype(np.float32)       # 1 where elem comes from qa+1
    SA = np.zeros((K, K), np.float32); SA[np.arange(K), qa] = 1.0
    SB = np.zeros((K, K), np.float32); SB[np.arange(K), qb] = 1.0
    grp_b = (K * C + np.arange(K)) // Cp1
    Sb = np.zeros((K, K), np.float32); Sb[np.arange(K), grp_b] = 1.0

    # ---- parameter folding (tiny glue) ----
    scale = params['bn_gamma'] * lax.rsqrt(params['bn_var'] + eps)
    shift = params['bn_beta'] - params['bn_mean'] * scale
    w1f = (params['w1'] * scale[:, None]).astype(jnp.bfloat16)   # BN scale folded in
    bnb = shift[:, None].astype(jnp.float32)                     # (C, 1) additive shift
    wg = params['wg'].astype(jnp.bfloat16)                       # (K, C)
    bg = params['bg'][:, None].astype(jnp.float32)               # (K, 1)

    wfp = params['wfp'].astype(jnp.float32)                      # (K*(C+1), C)
    bfp = params['bfp'].astype(jnp.float32)                      # (K*(C+1),)
    wfp_w = wfp[:K * C].reshape(K, C, C)                         # weight-part rows
    wfpA = wfp_w * (1.0 - mB)[:, :, None]                        # (K, C, C)
    wfpB = wfp_w * mB[:, :, None]                                # (K, C, C)
    bfp_w = bfp[:K * C].reshape(K, C)                            # (K, C)
    wfp_b = wfp[K * C:]                                          # (K, C) bias-part rows
    bfp_b = bfp[K * C:][:, None]                                 # (K, 1)

    # ---- features: NCHW -> (B, Cin, HW), consumed in bf16 ----
    feat = features.reshape(B, Cin, HW)
    if feat.dtype != jnp.bfloat16:
        # NOTE: in production the backbone should emit bf16 so this convert fuses
        # into the producer; the kernel always reads bf16 feat (halves HBM traffic).
        feat = feat.astype(jnp.bfloat16)
    if HWp != HW:
        feat = jnp.pad(feat, ((0, 0), (0, 0), (0, HWp - HW)))

    # ---- generation-aware scoped-VMEM budget ----
    out_bytes = jnp.dtype(out_dtype).itemsize
    est = int(2 * (Cin * HWp * 2)                 # feat bf16, double-buffered
              + 2 * (2 * K * HWp * out_bytes)     # cond+seg outputs, double-buffered
              + 6 * C * HWp                       # x1 f32/bf16 temporaries
              + 5 * 4 * K * HWp                   # g/e/gm/seg f32 temporaries
              + 4 * 1024 * 1024)                  # params + slack
    vmem_limit = int(max(32 * 1024 * 1024,
                         min(est, _physical_vmem_bytes() - 16 * 1024 * 1024)))

    kernel = _make_kernel(HW, HWp)

    cond, seg = pl.pallas_call(
        kernel,
        out_shape=(jax.ShapeDtypeStruct((B, K, HWp), out_dtype),
                   jax.ShapeDtypeStruct((B, K, HWp), out_dtype)),
        grid=(B,),
        in_specs=[
            pl.BlockSpec((1, Cin, HWp), lambda b: (b, 0, 0)),
            pl.BlockSpec((C, Cin), lambda b: (0, 0)),
            pl.BlockSpec((C, 1), lambda b: (0, 0)),
            pl.BlockSpec((K, C), lambda b: (0, 0)),
            pl.BlockSpec((K, 1), lambda b: (0, 0)),
            pl.BlockSpec((K, C, C), lambda b: (0, 0, 0)),
            pl.BlockSpec((K, C, C), lambda b: (0, 0, 0)),
            pl.BlockSpec((K, C), lambda b: (0, 0)),
            pl.BlockSpec((K, C), lambda b: (0, 0)),
            pl.BlockSpec((K, 1), lambda b: (0, 0)),
            pl.BlockSpec((K, K), lambda b: (0, 0)),
            pl.BlockSpec((K, K), lambda b: (0, 0)),
            pl.BlockSpec((K, K), lambda b: (0, 0)),
        ],
        out_specs=(
            pl.BlockSpec((1, K, HWp), lambda b: (b, 0, 0)),
            pl.BlockSpec((1, K, HWp), lambda b: (b, 0, 0)),
        ),
        compiler_params=pltpu.CompilerParams(
            dimension_semantics=("parallel",),
            vmem_limit_bytes=vmem_limit),
    )(feat, w1f, bnb, wg, bg, wfpA, wfpB, bfp_w, wfp_b, bfp_b,
      jnp.asarray(SA), jnp.asarray(SB), jnp.asarray(Sb))

    if HWp != HW:
        cond = cond[..., :HW]
        seg = seg[..., :HW]
    # (B, K, HW) is already NCHW order -> free reshape, no transpose
    return cond.reshape(B, K, H, W), seg.reshape(B, K, H, W)


# ---------------------------------------------------------------------------
# Pure-JAX reference (mirrors the PyTorch forward, NCHW, f32) for verification
# ---------------------------------------------------------------------------
def ref_forward(features, params, eps=1e-5):
    P = lax.Precision.HIGHEST
    B, Cin, H, W = features.shape
    C = params['w1'].shape[0]
    K = params['wg'].shape[0]
    scale = params['bn_gamma'] / jnp.sqrt(params['bn_var'] + eps)
    shift = params['bn_beta'] - params['bn_mean'] * scale
    x = jnp.einsum('bchw,oc->bohw', features, params['w1'], precision=P)
    x = jnp.maximum(x * scale[None, :, None, None] + shift[None, :, None, None], 0.0)
    g = jnp.einsum('bchw,kc->bkhw', x, params['wg'], precision=P) \
        + params['bg'][None, :, None, None]
    cond_logit = g
    gm = jax.nn.softmax(g, axis=1).reshape(B, K, H * W)
    key_ = x.reshape(B, C, H * W).transpose(0, 2, 1)
    cf = jnp.einsum('bkh,bhc->bkc', gm, key_, precision=P) / (H * W)
    wfp = params['wfp'].reshape(K, C + 1, C)
    bfp = params['bfp'].reshape(K, C + 1)
    fp = jnp.einsum('bkc,kdc->bkd', cf, wfp, precision=P) + bfp[None]
    full = fp.reshape(B, K * (C + 1))
    w_dyn = full[:, :K * C].reshape(B, K, C)
    b_dyn = full[:, K * C:]
    seg = jnp.einsum('bchw,bkc->bkhw', x, w_dyn, precision=P) \
        + b_dyn[:, :, None, None]
    return cond_logit, seg


if __name__ == "__main__":
    # small shapes consistent with the module: in_channel=64, channel=32, num_classes=5
    B, Cin, C, K, H, W = 2, 64, 32, 5, 16, 16

    key = jax.random.PRNGKey(0)
    ks = jax.random.split(key, 10)
    params = {
        'w1': jax.random.normal(ks[0], (C, Cin), jnp.float32) * 0.05,      # Conv2d(Cin,C,1,bias=False)
        'bn_gamma': 0.5 + jax.random.uniform(ks[1], (C,), jnp.float32),    # BatchNorm2d(C) params
        'bn_beta': jax.random.normal(ks[2], (C,), jnp.float32) * 0.1,
        'bn_mean': jax.random.normal(ks[3], (C,), jnp.float32) * 0.1,
        'bn_var': 0.5 + jax.random.uniform(ks[4], (C,), jnp.float32),
        'wg': jax.random.normal(ks[5], (K, C), jnp.float32) * 0.05,        # guidance_project
        'bg': jax.random.normal(ks[6], (K,), jnp.float32) * 0.1,
        'wfp': jax.random.normal(ks[7], (K * (C + 1), C), jnp.float32) * 0.05,  # filter_project (grouped)
        'bfp': jax.random.normal(ks[8], (K * (C + 1),), jnp.float32) * 0.1,
    }
    # Producer (backbone) emits bf16 activations: the kernel's dominant HBM read.
    features = jax.random.normal(ks[9], (B, Cin, H, W), jnp.float32).astype(jnp.bfloat16)

    cond_logit, seg_logit = jax.block_until_ready(cond_head_forward(features, params))

    ref_cond, ref_seg = ref_forward(features.astype(jnp.float32), params)
    np.testing.assert_allclose(np.asarray(jnp.asarray(cond_logit, jnp.float32)),
                               np.asarray(ref_cond), rtol=2e-2, atol=2e-2)
    np.testing.assert_allclose(np.asarray(jnp.asarray(seg_logit, jnp.float32)),
                               np.asarray(ref_seg), rtol=2e-2, atol=2e-2)

    print("KERNEL_OK")
</pallas_src>

<mosaic_0001>
module attributes {stable_mosaic.version = 11 : i64} {
  func.func @kernel(%arg0: i32, %arg1: memref<1x64x256xbf16, #tpu.memory_space<vmem>>, %arg2: memref<32x64xbf16, #tpu.memory_space<vmem>>, %arg3: memref<32x1xf32, #tpu.memory_space<vmem>>, %arg4: memref<5x32xbf16, #tpu.memory_space<vmem>>, %arg5: memref<5x1xf32, #tpu.memory_space<vmem>>, %arg6: memref<5x32x32xf32, #tpu.memory_space<vmem>>, %arg7: memref<5x32x32xf32, #tpu.memory_space<vmem>>, %arg8: memref<5x32xf32, #tpu.memory_space<vmem>>, %arg9: memref<5x32xf32, #tpu.memory_space<vmem>>, %arg10: memref<5x1xf32, #tpu.memory_space<vmem>>, %arg11: memref<5x5xf32, #tpu.memory_space<vmem>>, %arg12: memref<5x5xf32, #tpu.memory_space<vmem>>, %arg13: memref<5x5xf32, #tpu.memory_space<vmem>>, %arg14: memref<1x5x256xbf16, #tpu.memory_space<vmem>>, %arg15: memref<1x5x256xbf16, #tpu.memory_space<vmem>>) attributes {dimension_semantics = [#tpu.dimension_semantics<parallel>], iteration_bounds = array<i64: 2>, scalar_prefetch = 0 : i64, scratch_operands = 0 : i64, tpu.core_type = #tpu.core_type<tc>, window_params = [{transform_indices = @transform_0, window_bounds = array<i64: 1, 64, 256>}, {pipeline_mode = #tpu.pipeline_mode<synchronous>, transform_indices = @transform_1, window_bounds = array<i64: 32, 64>}, {pipeline_mode = #tpu.pipeline_mode<synchronous>, transform_indices = @transform_2, window_bounds = array<i64: 32, 1>}, {pipeline_mode = #tpu.pipeline_mode<synchronous>, transform_indices = @transform_3, window_bounds = array<i64: 5, 32>}, {pipeline_mode = #tpu.pipeline_mode<synchronous>, transform_indices = @transform_4, window_bounds = array<i64: 5, 1>}, {pipeline_mode = #tpu.pipeline_mode<synchronous>, transform_indices = @transform_5, window_bounds = array<i64: 5, 32, 32>}, {pipeline_mode = #tpu.pipeline_mode<synchronous>, transform_indices = @transform_6, window_bounds = array<i64: 5, 32, 32>}, {pipeline_mode = #tpu.pipeline_mode<synchronous>, transform_indices = @transform_7, window_bounds = array<i64: 5, 32>}, {pipeline_mode = #tpu.pipeline_mode<synchronous>, transform_indices = @transform_8, window_bounds = array<i64: 5, 32>}, {pipeline_mode = #tpu.pipeline_mode<synchronous>, transform_indices = @transform_9, window_bounds = array<i64: 5, 1>}, {pipeline_mode = #tpu.pipeline_mode<synchronous>, transform_indices = @transform_10, window_bounds = array<i64: 5, 5>}, {pipeline_mode = #tpu.pipeline_mode<synchronous>, transform_indices = @transform_11, window_bounds = array<i64: 5, 5>}, {pipeline_mode = #tpu.pipeline_mode<synchronous>, transform_indices = @transform_12, window_bounds = array<i64: 5, 5>}, {transform_indices = @transform_13, window_bounds = array<i64: 1, 5, 256>}, {transform_indices = @transform_14, window_bounds = array<i64: 1, 5, 256>}]} {
    %c0 = arith.constant 0 : index
    %c0_0 = arith.constant 0 : index
    %c0_1 = arith.constant 0 : index
    %0 = vector.load %arg1[%c0, %c0_0, %c0_1] : memref<1x64x256xbf16, #tpu.memory_space<vmem>>, vector<1x64x256xbf16>
    %1 = vector.shape_cast %0 : vector<1x64x256xbf16> to vector<64x256xbf16>
    %c0_2 = arith.constant 0 : index
    %c0_3 = arith.constant 0 : index
    %2 = vector.load %arg2[%c0_2, %c0_3] : memref<32x64xbf16, #tpu.memory_space<vmem>>, vector<32x64xbf16>
    %cst = arith.constant dense<0.000000e+00> : vector<32x256xf32>
    %3 = tpu.matmul %2, %1, %cst {dimension_numbers = #tpu.dot_dimension_numbers<[1], [0], [0], [1], [0, 0, 1, 1], [], []>} : vector<32x64xbf16>, vector<64x256xbf16>, vector<32x256xf32> -> vector<32x256xf32>
    %c0_4 = arith.constant 0 : index
    %c0_5 = arith.constant 0 : index
    %4 = vector.load %arg3[%c0_4, %c0_5] : memref<32x1xf32, #tpu.memory_space<vmem>>, vector<32x1xf32>
    %5 = vector.broadcast %4 : vector<32x1xf32> to vector<32x256xf32>
    %6 = arith.addf %3, %5 : vector<32x256xf32>
    %cst_6 = arith.constant 0.000000e+00 : f32
    %7 = vector.broadcast %cst_6 : f32 to vector<32x256xf32>
    %8 = arith.maximumf %6, %7 : vector<32x256xf32>
    %9 = arith.truncf %8 : vector<32x256xf32> to vector<32x256xbf16>
    %c0_7 = arith.constant 0 : index
    %c0_8 = arith.constant 0 : index
    %10 = vector.load %arg4[%c0_7, %c0_8] : memref<5x32xbf16, #tpu.memory_space<vmem>>, vector<5x32xbf16>
    %cst_9 = arith.constant dense<0.000000e+00> : vector<5x256xf32>
    %11 = tpu.matmul %10, %9, %cst_9 {dimension_numbers = #tpu.dot_dimension_numbers<[1], [0], [0], [1], [0, 0, 1, 1], [], []>} : vector<5x32xbf16>, vector<32x256xbf16>, vector<5x256xf32> -> vector<5x256xf32>
    %c0_10 = arith.constant 0 : index
    %c0_11 = arith.constant 0 : index
    %12 = vector.load %arg5[%c0_10, %c0_11] : memref<5x1xf32, #tpu.memory_space<vmem>>, vector<5x1xf32>
    %13 = vector.broadcast %12 : vector<5x1xf32> to vector<5x256xf32>
    %14 = arith.addf %11, %13 : vector<5x256xf32>
    %15 = arith.truncf %14 : vector<5x256xf32> to vector<5x256xbf16>
    %c0_12 = arith.constant 0 : index
    %c0_13 = arith.constant 0 : index
    %c0_14 = arith.constant 0 : index
    %16 = vector.load %arg14[%c0_12, %c0_13, %c0_14] : memref<1x5x256xbf16, #tpu.memory_space<vmem>>, vector<1x5x256xbf16>
    %17 = vector.shape_cast %16 : vector<1x5x256xbf16> to vector<5x256xbf16>
    %18 = vector.shape_cast %15 : vector<5x256xbf16> to vector<1x5x256xbf16>
    tpu.vector_store %arg14[%c0_12, %c0_13, %c0_14], %18 {strides = array<i32>} : memref<1x5x256xbf16, #tpu.memory_space<vmem>>, vector<1x5x256xbf16>,
    %cst_15 = arith.constant dense<0xFF800000> : vector<256xf32>
    %19 = vector.multi_reduction <maximumf>, %14, %cst_15 [0] : vector<5x256xf32> to vector<256xf32>
    %20 = vector.shape_cast %19 : vector<256xf32> to vector<1x256xf32>
    %21 = vector.broadcast %20 : vector<1x256xf32> to vector<5x256xf32>
    %22 = arith.subf %14, %21 : vector<5x256xf32>
    %23 = math.exp %22 : vector<5x256xf32>
    %cst_16 = arith.constant dense<0.000000e+00> : vector<256xf32>
    %24 = vector.multi_reduction <add>, %23, %cst_16 [0] : vector<5x256xf32> to vector<256xf32>
    %25 = vector.shape_cast %24 : vector<256xf32> to vector<1x256xf32>
    %26 = tpu.reciprocal %25 {approx = true} : vector<1x256xf32> -> vector<1x256xf32>
    %27 = vector.broadcast %26 : vector<1x256xf32> to vector<5x256xf32>
    %28 = arith.mulf %23, %27 : vector<5x256xf32>
    %29 = arith.truncf %28 : vector<5x256xf32> to vector<5x256xbf16>
    %cst_17 = arith.constant dense<0.000000e+00> : vector<5x32xf32>
    %30 = tpu.matmul %29, %9, %cst_17 {dimension_numbers = #tpu.dot_dimension_numbers<[1], [1], [0], [0], [0, 0, 1, 0], [], []>} : vector<5x256xbf16>, vector<32x256xbf16>, vector<5x32xf32> -> vector<5x32xf32>
    %cst_18 = arith.constant 3.906250e-03 : f32
    %31 = vector.broadcast %cst_18 : f32 to vector<5x32xf32>
    %32 = arith.mulf %30, %31 : vector<5x32xf32>
    %c0_19 = arith.constant 0 : index
    %c0_20 = arith.constant 0 : index
    %33 = vector.load %arg11[%c0_19, %c0_20] : memref<5x5xf32, #tpu.memory_space<vmem>>, vector<5x5xf32>
    %cst_21 = arith.constant dense<0.000000e+00> : vector<5x32xf32>
    %34 = tpu.matmul %33, %32, %cst_21 {dimension_numbers = #tpu.dot_dimension_numbers<[1], [0], [0], [1], [0, 0, 1, 1], [], []>} : vector<5x5xf32>, vector<5x32xf32>, vector<5x32xf32> -> vector<5x32xf32>
    %c0_22 = arith.constant 0 : index
    %c0_23 = arith.constant 0 : index
    %35 = vector.load %arg12[%c0_22, %c0_23] : memref<5x5xf32, #tpu.memory_space<vmem>>, vector<5x5xf32>
    %cst_24 = arith.constant dense<0.000000e+00> : vector<5x32xf32>
    %36 = tpu.matmul %35, %32, %cst_24 {dimension_numbers = #tpu.dot_dimension_numbers<[1], [0], [0], [1], [0, 0, 1, 1], [], []>} : vector<5x5xf32>, vector<5x32xf32>, vector<5x32xf32> -> vector<5x32xf32>
    %c0_25 = arith.constant 0 : index
    %c0_26 = arith.constant 0 : index
    %37 = vector.load %arg13[%c0_25, %c0_26] : memref<5x5xf32, #tpu.memory_space<vmem>>, vector<5x5xf32>
    %cst_27 = arith.constant dense<0.000000e+00> : vector<5x32xf32>
    %38 = tpu.matmul %37, %32, %cst_27 {dimension_numbers = #tpu.dot_dimension_numbers<[1], [0], [0], [1], [0, 0, 1, 1], [], []>} : vector<5x5xf32>, vector<5x32xf32>, vector<5x32xf32> -> vector<5x32xf32>
    %c0_28 = arith.constant 0 : index
    %c0_29 = arith.constant 0 : index
    %c0_30 = arith.constant 0 : index
    %39 = vector.load %arg6[%c0_28, %c0_29, %c0_30] : memref<5x32x32xf32, #tpu.memory_space<vmem>>, vector<5x32x32xf32>
    %40 = vector.shape_cast %34 : vector<5x32xf32> to vector<5x1x32xf32>
    %41 = vector.broadcast %40 : vector<5x1x32xf32> to vector<5x32x32xf32>
    %42 = arith.mulf %39, %41 : vector<5x32x32xf32>
    %cst_31 = arith.constant dense<0.000000e+00> : vector<5x32xf32>
    %43 = vector.multi_reduction <add>, %42, %cst_31 [2] : vector<5x32x32xf32> to vector<5x32xf32>
    %c0_32 = arith.constant 0 : index
    %c0_33 = arith.constant 0 : index
    %c0_34 = arith.constant 0 : index
    %44 = vector.load %arg7[%c0_32, %c0_33, %c0_34] : memref<5x32x32xf32, #tpu.memory_space<vmem>>, vector<5x32x32xf32>
    %45 = vector.shape_cast %36 : vector<5x32xf32> to vector<5x1x32xf32>
    %46 = vector.broadcast %45 : vector<5x1x32xf32> to vector<5x32x32xf32>
    %47 = arith.mulf %44, %46 : vector<5x32x32xf32>
    %cst_35 = arith.constant dense<0.000000e+00> : vector<5x32xf32>
    %48 = vector.multi_reduction <add>, %47, %cst_35 [2] : vector<5x32x32xf32> to vector<5x32xf32>
    %49 = arith.addf %43, %48 : vector<5x32xf32>
    %c0_36 = arith.constant 0 : index
    %c0_37 = arith.constant 0 : index
    %50 = vector.load %arg8[%c0_36, %c0_37] : memref<5x32xf32, #tpu.memory_space<vmem>>, vector<5x32xf32>
    %51 = arith.addf %49, %50 : vector<5x32xf32>
    %c0_38 = arith.constant 0 : index
    %c0_39 = arith.constant 0 : index
    %52 = vector.load %arg9[%c0_38, %c0_39] : memref<5x32xf32, #tpu.memory_space<vmem>>, vector<5x32xf32>
    %53 = arith.mulf %52, %38 : vector<5x32xf32>
    %cst_40 = arith.constant dense<0.000000e+00> : vector<5xf32>
    %54 = vector.multi_reduction <add>, %53, %cst_40 [1] : vector<5x32xf32> to vector<5xf32>
    %55 = vector.shape_cast %54 : vector<5xf32> to vector<5x1xf32>
    %c0_41 = arith.constant 0 : index
    %c0_42 = arith.constant 0 : index
    %56 = vector.load %arg10[%c0_41, %c0_42] : memref<5x1xf32, #tpu.memory_space<vmem>>, vector<5x1xf32>
    %57 = arith.addf %55, %56 : vector<5x1xf32>
    %58 = arith.truncf %51 : vector<5x32xf32> to vector<5x32xbf16>
    %cst_43 = arith.constant dense<0.000000e+00> : vector<5x256xf32>
    %59 = tpu.matmul %58, %9, %cst_43 {dimension_numbers = #tpu.dot_dimension_numbers<[1], [0], [0], [1], [0, 0, 1, 1], [], []>} : vector<5x32xbf16>, vector<32x256xbf16>, vector<5x256xf32> -> vector<5x256xf32>
    %60 = vector.broadcast %57 : vector<5x1xf32> to vector<5x256xf32>
    %61 = arith.addf %59, %60 : vector<5x256xf32>
    %62 = arith.truncf %61 : vector<5x256xf32> to vector<5x256xbf16>
    %c0_44 = arith.constant 0 : index
    %c0_45 = arith.constant 0 : index
    %c0_46 = arith.constant 0 : index
    %63 = vector.load %arg15[%c0_44, %c0_45, %c0_46] : memref<1x5x256xbf16, #tpu.memory_space<vmem>>, vector<1x5x256xbf16>
    %64 = vector.shape_cast %63 : vector<1x5x256xbf16> to vector<5x256xbf16>
    %65 = vector.shape_cast %62 : vector<5x256xbf16> to vector<1x5x256xbf16>
    tpu.vector_store %arg15[%c0_44, %c0_45, %c0_46], %65 {strides = array<i32>} : memref<1x5x256xbf16, #tpu.memory_space<vmem>>, vector<1x5x256xbf16>,
    return
  }
  func.func @transform_0(%arg0: i32) -> (i32, i32, i32) {
    %c0_i32 = arith.constant 0 : i32
    %c0_i32_0 = arith.constant 0 : i32
    %c0_i32_1 = arith.constant 0 : i32
    return %arg0, %c0_i32, %c0_i32_0 : i32, i32, i32
  }
  func.func @transform_1(%arg0: i32) -> (i32, i32) {
    %c0_i32 = arith.constant 0 : i32
    %c0_i32_0 = arith.constant 0 : i32
    %c0_i32_1 = arith.constant 0 : i32
    return %c0_i32, %c0_i32_0 : i32, i32
  }
  func.func @transform_2(%arg0: i32) -> (i32, i32) {
    %c0_i32 = arith.constant 0 : i32
    %c0_i32_0 = arith.constant 0 : i32
    %c0_i32_1 = arith.constant 0 : i32
    return %c0_i32, %c0_i32_0 : i32, i32
  }
  func.func @transform_3(%arg0: i32) -> (i32, i32) {
    %c0_i32 = arith.constant 0 : i32
    %c0_i32_0 = arith.constant 0 : i32
    %c0_i32_1 = arith.constant 0 : i32
    return %c0_i32, %c0_i32_0 : i32, i32
  }
  func.func @transform_4(%arg0: i32) -> (i32, i32) {
    %c0_i32 = arith.constant 0 : i32
    %c0_i32_0 = arith.constant 0 : i32
    %c0_i32_1 = arith.constant 0 : i32
    return %c0_i32, %c0_i32_0 : i32, i32
  }
  func.func @transform_5(%arg0: i32) -> (i32, i32, i32) {
    %c0_i32 = arith.constant 0 : i32
    %c0_i32_0 = arith.constant 0 : i32
    %c0_i32_1 = arith.constant 0 : i32
    %c0_i32_2 = arith.constant 0 : i32
    return %c0_i32, %c0_i32_0, %c0_i32_1 : i32, i32, i32
  }
  func.func @transform_6(%arg0: i32) -> (i32, i32, i32) {
    %c0_i32 = arith.constant 0 : i32
    %c0_i32_0 = arith.constant 0 : i32
    %c0_i32_1 = arith.constant 0 : i32
    %c0_i32_2 = arith.constant 0 : i32
    return %c0_i32, %c0_i32_0, %c0_i32_1 : i32, i32, i32
  }
  func.func @transform_7(%arg0: i32) -> (i32, i32) {
    %c0_i32 = arith.constant 0 : i32
    %c0_i32_0 = arith.constant 0 : i32
    %c0_i32_1 = arith.constant 0 : i32
    return %c0_i32, %c0_i32_0 : i32, i32
  }
  func.func @transform_8(%arg0: i32) -> (i32, i32) {
    %c0_i32 = arith.constant 0 : i32
    %c0_i32_0 = arith.constant 0 : i32
    %c0_i32_1 = arith.constant 0 : i32
    return %c0_i32, %c0_i32_0 : i32, i32
  }
  func.func @transform_9(%arg0: i32) -> (i32, i32) {
    %c0_i32 = arith.constant 0 : i32
    %c0_i32_0 = arith.constant 0 : i32
    %c0_i32_1 = arith.constant 0 : i32
    return %c0_i32, %c0_i32_0 : i32, i32
  }
  func.func @transform_10(%arg0: i32) -> (i32, i32) {
    %c0_i32 = arith.constant 0 : i32
    %c0_i32_0 = arith.constant 0 : i32
    %c0_i32_1 = arith.constant 0 : i32
    return %c0_i32, %c0_i32_0 : i32, i32
  }
  func.func @transform_11(%arg0: i32) -> (i32, i32) {
    %c0_i32 = arith.constant 0 : i32
    %c0_i32_0 = arith.constant 0 : i32
    %c0_i32_1 = arith.constant 0 : i32
    return %c0_i32, %c0_i32_0 : i32, i32
  }
  func.func @transform_12(%arg0: i32) -> (i32, i32) {
    %c0_i32 = arith.constant 0 : i32
    %c0_i32_0 = arith.constant 0 : i32
    %c0_i32_1 = arith.constant 0 : i32
    return %c0_i32, %c0_i32_0 : i32, i32
  }
  func.func @transform_13(%arg0: i32) -> (i32, i32, i32) {
    %c0_i32 = arith.constant 0 : i32
    %c0_i32_0 = arith.constant 0 : i32
    %c0_i32_1 = arith.constant 0 : i32
    return %arg0, %c0_i32, %c0_i32_0 : i32, i32, i32
  }
  func.func @transform_14(%arg0: i32) -> (i32, i32, i32) {
    %c0_i32 = arith.constant 0 : i32
    %c0_i32_0 = arith.constant 0 : i32
    %c0_i32_1 = arith.constant 0 : i32
    return %arg0, %c0_i32, %c0_i32_0 : i32, i32, i32
  }
}

</mosaic_0001>

<llo_original>
// kernel: cond_head_forward.1
$region0: #{cond_head_forward.1}
  #allocation0 [shape = 'u32[]', space=smem, size = 0x4, offset = 0x4, fixed_abs, tag = 'smem constant byte address 0x4 - core index']
  #allocation1 [shape = 'u32[144,128]{1,0:T(1,128)}', space=vmem, size = 0x12000, scoped, tag = 'internal scratch']
  %s0 = inlined_call_operand.vmem [shape: bf16[2,64,256], index: 0, kind: input, shape index: {}]
  %s1 = inlined_call_operand.vmem [shape: bf16[32,64], index: 1, kind: input, shape index: {}]
  %s2 = inlined_call_operand.vmem [shape: f32[32,1], index: 2, kind: input, shape index: {}]
  %s3 = inlined_call_operand.vmem [shape: bf16[5,32], index: 3, kind: input, shape index: {}]
  %s4 = inlined_call_operand.vmem [shape: f32[5,1], index: 4, kind: input, shape index: {}]
  %s5 = inlined_call_operand.vmem [shape: f32[5,32,32], index: 5, kind: input, shape index: {}]
  %s6 = inlined_call_operand.vmem [shape: f32[5,32,32], index: 6, kind: input, shape index: {}]
  %s7 = inlined_call_operand.vmem [shape: f32[5,32], index: 7, kind: input, shape index: {}]
  %s8 = inlined_call_operand.vmem [shape: f32[5,32], index: 8, kind: input, shape index: {}]
  %s9 = inlined_call_operand.vmem [shape: f32[5,1], index: 9, kind: input, shape index: {}]
  %s10 = inlined_call_operand.vmem [shape: f32[5,5], index: 10, kind: input, shape index: {}]
  %s11 = inlined_call_operand.vmem [shape: f32[5,5], index: 11, kind: input, shape index: {}]
  %s12 = inlined_call_operand.vmem [shape: f32[5,5], index: 12, kind: input, shape index: {}]
  %s13 = inlined_call_operand.vmem [shape: bf16[2,5,256], index: 13, kind: output, shape index: {0}]
  %s14 = inlined_call_operand.vmem [shape: bf16[2,5,256], index: 14, kind: output, shape index: {1}]
  %15 = xla_tuple %s13, %s14
  %s16 = sld [smem:[#allocation0]]
  $region93: #{cond_head_forward.1} parent=0
    _
  %s18 = ssub.s32 1, %s16
  %s19 = scalar_select 0, %s18, %s16
  loop: start=0, step=1, limit=4
  $region2: #{cond_head_forward.1} parent=0 // loop_pre_header
    _
  $region3: #{cond_head_forward.1} parent=0 // loop_header
    %s21 = sphi 0, %s25
    %p22 = scmp.ge.s32.totalorder %s21, 4
    %s31 = sphi 0, %s33
    %s34 = sphi 0, %s31
    %s35 = sphi 0, %s34
    %s51 = sphi 0, %s35
    %s55 = sphi 0, %s55
    %s57 = sphi 0, %s55
    %s58 = sphi 0, %s57
    %s72 = sphi 0, %s58
    %s76 = sphi 0, %s76
    %s78 = sphi 0, %s76
    %s79 = sphi 0, %s78
    %s93 = sphi 0, %s79
    %s97 = sphi 0, %s97
    %s99 = sphi 0, %s97
    %s100 = sphi 0, %s99
    %s114 = sphi 0, %s100
    %s118 = sphi 0, %s118
    %s120 = sphi 0, %s118
    %s121 = sphi 0, %s120
    %s135 = sphi 0, %s121
    %s139 = sphi 0, %s139
    %s141 = sphi 0, %s139
    %s142 = sphi 0, %s141
    %s156 = sphi 0, %s142
    %s160 = sphi 0, %s160
    %s162 = sphi 0, %s160
    %s163 = sphi 0, %s162
    %s177 = sphi 0, %s163
    %s181 = sphi 0, %s181
    %s183 = sphi 0, %s181
    %s184 = sphi 0, %s183
    %s198 = sphi 0, %s184
    %s202 = sphi 0, %s202
    %s204 = sphi 0, %s202
    %s205 = sphi 0, %s204
    %s219 = sphi 0, %s205
    %s223 = sphi 0, %s223
    %s225 = sphi 0, %s223
    %s226 = sphi 0, %s225
    %s240 = sphi 0, %s226
    %s244 = sphi 0, %s244
    %s246 = sphi 0, %s244
    %s247 = sphi 0, %s246
    %s261 = sphi 0, %s247
    %s265 = sphi 0, %s265
    %s267 = sphi 0, %s265
    %s268 = sphi 0, %s267
    %s282 = sphi 0, %s268
    %s286 = sphi 0, %s286
    %s288 = sphi 0, %s286
    %s289 = sphi 0, %s288
    %s303 = sphi 0, %s289
    %s309 = sphi 0, %s311
    %s312 = sphi 0, %s309
    %s313 = sphi 0, %s312
    %s329 = sphi 0, %s313
    %s335 = sphi 0, %s337
    %s338 = sphi 0, %s335
    %s339 = sphi 0, %s338
    %s355 = sphi 0, %s339
  $region4: #{cond_head_forward.1} parent=0 // loop_header_branch
    %24 = sbr.rel (%p22) target = $region8
  $region5: #{cond_head_forward.1} parent=0 // loop_body
    %s26 = ssub.s32 %s21, 1
    %s27 = ssub.s32 %s21, 2
    %s28 = sadd.s32 %s21, 1
    %s29 = ssub.s32 %s21, %s28
    %p30 = scmp.eq.s32.totalorder %s29, 0
    %s32 = sadd.s32 %s31, 1
    %s33 = scalar_select %p30, %s31, %s32
    %p36 = pneg %p30
    %p37 = scmp.eq.s32.totalorder %s21, 1
    %p38 = por %p36, %p37
    %p39 = scmp.ne.s32.totalorder %s31, %s34
    %p40 = scmp.eq.s32.totalorder %s21, 0
    %p41 = por %p39, %p40
    %p42 = scmp.ne.s32.totalorder %s31, %s34
    %p43 = scmp.eq.s32.totalorder %s26, 1
    %p44 = por %p42, %p43
    %p45 = scmp.ne.s32.totalorder %s34, %s35
    %p46 = scmp.eq.s32.totalorder %s26, 0
    %p47 = por %p45, %p46
    %p48 = scmp.ne.s32.totalorder %s34, %s35
    %p49 = scmp.eq.s32.totalorder %s27, 1
    %p50 = por %p48, %p49
    %p52 = scmp.ne.s32.totalorder %s35, %s51
    %p53 = scmp.eq.s32.totalorder %s27, 0
    %p54 = por %p52, %p53
    %s56 = sadd.s32 %s55, 1
    %p59 = scmp.eq.s32.totalorder %s21, 1
    %p60 = scmp.ne.s32.totalorder %s55, %s57
    %p61 = scmp.eq.s32.totalorder %s21, 0
    %p62 = por %p60, %p61
    %p63 = scmp.ne.s32.totalorder %s55, %s57
    %p64 = scmp.eq.s32.totalorder %s26, 1
    %p65 = por %p63, %p64
    %p66 = scmp.ne.s32.totalorder %s57, %s58
    %p67 = scmp.eq.s32.totalorder %s26, 0
    %p68 = por %p66, %p67
    %p69 = scmp.ne.s32.totalorder %s57, %s58
    %p70 = scmp.eq.s32.totalorder %s27, 1
    %p71 = por %p69, %p70
    %p73 = scmp.ne.s32.totalorder %s58, %s72
    %p74 = scmp.eq.s32.totalorder %s27, 0
    %p75 = por %p73, %p74
    %s77 = sadd.s32 %s76, 1
    %p80 = scmp.eq.s32.totalorder %s21, 1
    %p81 = scmp.ne.s32.totalorder %s76, %s78
    %p82 = scmp.eq.s32.totalorder %s21, 0
    %p83 = por %p81, %p82
    %p84 = scmp.ne.s32.totalorder %s76, %s78
    %p85 = scmp.eq.s32.totalorder %s26, 1
    %p86 = por %p84, %p85
    %p87 = scmp.ne.s32.totalorder %s78, %s79
    %p88 = scmp.eq.s32.totalorder %s26, 0
    %p89 = por %p87, %p88
    %p90 = scmp.ne.s32.totalorder %s78, %s79
    %p91 = scmp.eq.s32.totalorder %s27, 1
    %p92 = por %p90, %p91
    %p94 = scmp.ne.s32.totalorder %s79, %s93
    %p95 = scmp.eq.s32.totalorder %s27, 0
    %p96 = por %p94, %p95
    %s98 = sadd.s32 %s97, 1
    %p101 = scmp.eq.s32.totalorder %s21, 1
    %p102 = scmp.ne.s32.totalorder %s97, %s99
    %p103 = scmp.eq.s32.totalorder %s21, 0
    %p104 = por %p102, %p103
    %p105 = scmp.ne.s32.totalorder %s97, %s99
    %p106 = scmp.eq.s32.totalorder %s26, 1
    %p107 = por %p105, %p106
    %p108 = scmp.ne.s32.totalorder %s99, %s100
    %p109 = scmp.eq.s32.totalorder %s26, 0
    %p110 = por %p108, %p109
    %p111 = scmp.ne.s32.totalorder %s99, %s100
    %p112 = scmp.eq.s32.totalorder %s27, 1
    %p113 = por %p111, %p112
    %p115 = scmp.ne.s32.totalorder %s100, %s114
    %p116 = scmp.eq.s32.totalorder %s27, 0
    %p117 = por %p115, %p116
    %s119 = sadd.s32 %s118, 1
    %p122 = scmp.eq.s32.totalorder %s21, 1
    %p123 = scmp.ne.s32.totalorder %s118, %s120
    %p124 = scmp.eq.s32.totalorder %s21, 0
    %p125 = por %p123, %p124
    %p126 = scmp.ne.s32.totalorder %s118, %s120
    %p127 = scmp.eq.s32.totalorder %s26, 1
    %p128 = por %p126, %p127
    %p129 = scmp.ne.s32.totalorder %s120, %s121
    %p130 = scmp.eq.s32.totalorder %s26, 0
    %p131 = por %p129, %p130
    %p132 = scmp.ne.s32.totalorder %s120, %s121
    %p133 = scmp.eq.s32.totalorder %s27, 1
    %p134 = por %p132, %p133
    %p136 = scmp.ne.s32.totalorder %s121, %s135
    %p137 = scmp.eq.s32.totalorder %s27, 0
    %p138 = por %p136, %p137
    %s140 = sadd.s32 %s139, 1
    %p143 = scmp.eq.s32.totalorder %s21, 1
    %p144 = scmp.ne.s32.totalorder %s139, %s141
    %p145 = scmp.eq.s32.totalorder %s21, 0
    %p146 = por %p144, %p145
    %p147 = scmp.ne.s32.totalorder %s139, %s141
    %p148 = scmp.eq.s32.totalorder %s26, 1
    %p149 = por %p147, %p148
    %p150 = scmp.ne.s32.totalorder %s141, %s142
    %p151 = scmp.eq.s32.totalorder %s26, 0
    %p152 = por %p150, %p151
    %p153 = scmp.ne.s32.totalorder %s141, %s142
    %p154 = scmp.eq.s32.totalorder %s27, 1
    %p155 = por %p153, %p154
    %p157 = scmp.ne.s32.totalorder %s142, %s156
    %p158 = scmp.eq.s32.totalorder %s27, 0
    %p159 = por %p157, %p158
    %s161 = sadd.s32 %s160, 1
    %p164 = scmp.eq.s32.totalorder %s21, 1
    %p165 = scmp.ne.s32.totalorder %s160, %s162
    %p166 = scmp.eq.s32.totalorder %s21, 0
    %p167 = por %p165, %p166
    %p168 = scmp.ne.s32.totalorder %s160, %s162
    %p169 = scmp.eq.s32.totalorder %s26, 1
    %p170 = por %p168, %p169
    %p171 = scmp.ne.s32.totalorder %s162, %s163
    %p172 = scmp.eq.s32.totalorder %s26, 0
    %p173 = por %p171, %p172
    %p174 = scmp.ne.s32.totalorder %s162, %s163
    %p175 = scmp.eq.s32.totalorder %s27, 1
    %p176 = por %p174, %p175
    %p178 = scmp.ne.s32.totalorder %s163, %s177
    %p179 = scmp.eq.s32.totalorder %s27, 0
    %p180 = por %p178, %p179
    %s182 = sadd.s32 %s181, 1
    %p185 = scmp.eq.s32.totalorder %s21, 1
    %p186 = scmp.ne.s32.totalorder %s181, %s183
    %p187 = scmp.eq.s32.totalorder %s21, 0
    %p188 = por %p186, %p187
    %p189 = scmp.ne.s32.totalorder %s181, %s183
    %p190 = scmp.eq.s32.totalorder %s26, 1
    %p191 = por %p189, %p190
    %p192 = scmp.ne.s32.totalorder %s183, %s184
    %p193 = scmp.eq.s32.totalorder %s26, 0
    %p194 = por %p192, %p193
    %p195 = scmp.ne.s32.totalorder %s183, %s184
    %p196 = scmp.eq.s32.totalorder %s27, 1
    %p197 = por %p195, %p196
    %p199 = scmp.ne.s32.totalorder %s184, %s198
    %p200 = scmp.eq.s32.totalorder %s27, 0
    %p201 = por %p199, %p200
    %s203 = sadd.s32 %s202, 1
    %p206 = scmp.eq.s32.totalorder %s21, 1
    %p207 = scmp.ne.s32.totalorder %s202, %s204
    %p208 = scmp.eq.s32.totalorder %s21, 0
    %p209 = por %p207, %p208
    %p210 = scmp.ne.s32.totalorder %s202, %s204
    %p211 = scmp.eq.s32.totalorder %s26, 1
    %p212 = por %p210, %p211
    %p213 = scmp.ne.s32.totalorder %s204, %s205
    %p214 = scmp.eq.s32.totalorder %s26, 0
    %p215 = por %p213, %p214
    %p216 = scmp.ne.s32.totalorder %s204, %s205
    %p217 = scmp.eq.s32.totalorder %s27, 1
    %p218 = por %p216, %p217
    %p220 = scmp.ne.s32.totalorder %s205, %s219
    %p221 = scmp.eq.s32.totalorder %s27, 0
    %p222 = por %p220, %p221
    %s224 = sadd.s32 %s223, 1
    %p227 = scmp.eq.s32.totalorder %s21, 1
    %p228 = scmp.ne.s32.totalorder %s223, %s225
    %p229 = scmp.eq.s32.totalorder %s21, 0
    %p230 = por %p228, %p229
    %p231 = scmp.ne.s32.totalorder %s223, %s225
    %p232 = scmp.eq.s32.totalorder %s26, 1
    %p233 = por %p231, %p232
    %p234 = scmp.ne.s32.totalorder %s225, %s226
    %p235 = scmp.eq.s32.totalorder %s26, 0
    %p236 = por %p234, %p235
    %p237 = scmp.ne.s32.totalorder %s225, %s226
    %p238 = scmp.eq.s32.totalorder %s27, 1
    %p239 = por %p237, %p238
    %p241 = scmp.ne.s32.totalorder %s226, %s240
    %p242 = scmp.eq.s32.totalorder %s27, 0
    %p243 = por %p241, %p242
    %s245 = sadd.s32 %s244, 1
    %p248 = scmp.eq.s32.totalorder %s21, 1
    %p249 = scmp.ne.s32.totalorder %s244, %s246
    %p250 = scmp.eq.s32.totalorder %s21, 0
    %p251 = por %p249, %p250
    %p252 = scmp.ne.s32.totalorder %s244, %s246
    %p253 = scmp.eq.s32.totalorder %s26, 1
    %p254 = por %p252, %p253
    %p255 = scmp.ne.s32.totalorder %s246, %s247
    %p256 = scmp.eq.s32.totalorder %s26, 0
    %p257 = por %p255, %p256
    %p258 = scmp.ne.s32.totalorder %s246, %s247
    %p259 = scmp.eq.s32.totalorder %s27, 1
    %p260 = por %p258, %p259
    %p262 = scmp.ne.s32.totalorder %s247, %s261
    %p263 = scmp.eq.s32.totalorder %s27, 0
    %p264 = por %p262, %p263
    %s266 = sadd.s32 %s265, 1
    %p269 = scmp.eq.s32.totalorder %s21, 1
    %p270 = scmp.ne.s32.totalorder %s265, %s267
    %p271 = scmp.eq.s32.totalorder %s21, 0
    %p272 = por %p270, %p271
    %p273 = scmp.ne.s32.totalorder %s265, %s267
    %p274 = scmp.eq.s32.totalorder %s26, 1
    %p275 = por %p273, %p274
    %p276 = scmp.ne.s32.totalorder %s267, %s268
    %p277 = scmp.eq.s32.totalorder %s26, 0
    %p278 = por %p276, %p277
    %p279 = scmp.ne.s32.totalorder %s267, %s268
    %p280 = scmp.eq.s32.totalorder %s27, 1
    %p281 = por %p279, %p280
    %p283 = scmp.ne.s32.totalorder %s268, %s282
    %p284 = scmp.eq.s32.totalorder %s27, 0
    %p285 = por %p283, %p284
    %s287 = sadd.s32 %s286, 1
    %p290 = scmp.eq.s32.totalorder %s21, 1
    %p291 = scmp.ne.s32.totalorder %s286, %s288
    %p292 = scmp.eq.s32.totalorder %s21, 0
    %p293 = por %p291, %p292
    %p294 = scmp.ne.s32.totalorder %s286, %s288
    %p295 = scmp.eq.s32.totalorder %s26, 1
    %p296 = por %p294, %p295
    %p297 = scmp.ne.s32.totalorder %s288, %s289
    %p298 = scmp.eq.s32.totalorder %s26, 0
    %p299 = por %p297, %p298
    %p300 = scmp.ne.s32.totalorder %s288, %s289
    %p301 = scmp.eq.s32.totalorder %s27, 1
    %p302 = por %p300, %p301
    %p304 = scmp.ne.s32.totalorder %s289, %s303
    %p305 = scmp.eq.s32.totalorder %s27, 0
    %p306 = por %p304, %p305
    %s307 = ssub.s32 %s21, %s28
    %p308 = scmp.eq.s32.totalorder %s307, 0
    %s310 = sadd.s32 %s309, 1
    %s311 = scalar_select %p308, %s309, %s310
    %p314 = pneg %p308
    %p315 = scmp.eq.s32.totalorder %s21, 1
    %p316 = por %p314, %p315
    %p317 = scmp.ne.s32.totalorder %s309, %s312
    %p318 = scmp.eq.s32.totalorder %s21, 0
    %p319 = por %p317, %p318
    %p320 = scmp.ne.s32.totalorder %s309, %s312
    %p321 = scmp.eq.s32.totalorder %s26, 1
    %p322 = por %p320, %p321
    %p323 = scmp.ne.s32.totalorder %s312, %s313
    %p324 = scmp.eq.s32.totalorder %s26, 0
    %p325 = por %p323, %p324
    %p326 = scmp.ne.s32.totalorder %s312, %s313
    %p327 = scmp.eq.s32.totalorder %s27, 1
    %p328 = por %p326, %p327
    %p330 = scmp.ne.s32.totalorder %s313, %s329
    %p331 = scmp.eq.s32.totalorder %s27, 0
    %p332 = por %p330, %p331
    %s333 = ssub.s32 %s21, %s28
    %p334 = scmp.eq.s32.totalorder %s333, 0
    %s336 = sadd.s32 %s335, 1
    %s337 = scalar_select %p334, %s335, %s336
    %p340 = pneg %p334
    %p341 = scmp.eq.s32.totalorder %s21, 1
    %p342 = por %p340, %p341
    %p343 = scmp.ne.s32.totalorder %s335, %s338
    %p344 = scmp.eq.s32.totalorder %s21, 0
    %p345 = por %p343, %p344
    %p346 = scmp.ne.s32.totalorder %s335, %s338
    %p347 = scmp.eq.s32.totalorder %s26, 1
    %p348 = por %p346, %p347
    %p349 = scmp.ne.s32.totalorder %s338, %s339
    %p350 = scmp.eq.s32.totalorder %s26, 0
    %p351 = por %p349, %p350
    %p352 = scmp.ne.s32.totalorder %s338, %s339
    %p353 = scmp.eq.s32.totalorder %s27, 1
    %p354 = por %p352, %p353
    %p356 = scmp.ne.s32.totalorder %s339, %s355
    %p357 = scmp.eq.s32.totalorder %s27, 0
    %p358 = por %p356, %p357
    %p359 = scmp.le.s32.totalorder 1, %s21
    %p360 = scmp.lt.s32.totalorder %s21, 3
    %p361 = pnand %p359, %p360
    %p362 = pneg %p361
    // Predicated region
    $region9: #{cond_head_forward.1} parent=5 // pred_check
      _
    $region10: #{cond_head_forward.1} parent=5 // pred_check_branch
      %364 = sbr.rel (%p361) target = $region12
    $region11: #{cond_head_forward.1} parent=5 // pred_region
      %s365 = ssub.s32 %s21, 1
      // Predicated region
      $region13: #{cond_head_forward.1} parent=11 // pred_check
        %p366 = pneg %p68
      $region14: #{cond_head_forward.1} parent=11 // pred_check_branch
        %368 = sbr.rel (%p366) target = $region16
      $region15: #{cond_head_forward.1} parent=11 // pred_region
        _
      $region16: #{cond_head_forward.1} parent=11 // pred_fallthru
        _
      // Predicated region
      $region17: #{cond_head_forward.1} parent=11 // pred_check
        %p369 = pneg %p89
      $region18: #{cond_head_forward.1} parent=11 // pred_check_branch
        %371 = sbr.rel (%p369) target = $region20
      $region19: #{cond_head_forward.1} parent=11 // pred_region
        _
      $region20: #{cond_head_forward.1} parent=11 // pred_fallthru
        _
      // Predicated region
      $region21: #{cond_head_forward.1} parent=11 // pred_check
        %p372 = pneg %p110
      $region22: #{cond_head_forward.1} parent=11 // pred_check_branch
        %374 = sbr.rel (%p372) target = $region24
      $region23: #{cond_head_forward.1} parent=11 // pred_region
        _
      $region24: #{cond_head_forward.1} parent=11 // pred_fallthru
        _
      // Predicated region
      $region25: #{cond_head_forward.1} parent=11 // pred_check
        %p375 = pneg %p131
      $region26: #{cond_head_forward.1} parent=11 // pred_check_branch
        %377 = sbr.rel (%p375) target = $region28
      $region27: #{cond_head_forward.1} parent=11 // pred_region
        _
      $region28: #{cond_head_forward.1} parent=11 // pred_fallthru
        _
      // Predicated region
      $region29: #{cond_head_forward.1} parent=11 // pred_check
        %p378 = pneg %p152
      $region30: #{cond_head_forward.1} parent=11 // pred_check_branch
        %380 = sbr.rel (%p378) target = $region32
      $region31: #{cond_head_forward.1} parent=11 // pred_region
        _
      $region32: #{cond_head_forward.1} parent=11 // pred_fallthru
        _
      // Predicated region
      $region33: #{cond_head_forward.1} parent=11 // pred_check
        %p381 = pneg %p173
      $region34: #{cond_head_forward.1} parent=11 // pred_check_branch
        %383 = sbr.rel (%p381) target = $region36
      $region35: #{cond_head_forward.1} parent=11 // pred_region
        _
      $region36: #{cond_head_forward.1} parent=11 // pred_fallthru
        _
      // Predicated region
      $region37: #{cond_head_forward.1} parent=11 // pred_check
        %p384 = pneg %p194
      $region38: #{cond_head_forward.1} parent=11 // pred_check_branch
        %386 = sbr.rel (%p384) target = $region40
      $region39: #{cond_head_forward.1} parent=11 // pred_region
        _
      $region40: #{cond_head_forward.1} parent=11 // pred_fallthru
        _
      // Predicated region
      $region41: #{cond_head_forward.1} parent=11 // pred_check
        %p387 = pneg %p215
      $region42: #{cond_head_forward.1} parent=11 // pred_check_branch
        %389 = sbr.rel (%p387) target = $region44
      $region43: #{cond_head_forward.1} parent=11 // pred_region
        _
      $region44: #{cond_head_forward.1} parent=11 // pred_fallthru
        _
      // Predicated region
      $region45: #{cond_head_forward.1} parent=11 // pred_check
        %p390 = pneg %p236
      $region46: #{cond_head_forward.1} parent=11 // pred_check_branch
        %392 = sbr.rel (%p390) target = $region48
      $region47: #{cond_head_forward.1} parent=11 // pred_region
        _
      $region48: #{cond_head_forward.1} parent=11 // pred_fallthru
        _
      // Predicated region
      $region49: #{cond_head_forward.1} parent=11 // pred_check
        %p393 = pneg %p257
      $region50: #{cond_head_forward.1} parent=11 // pred_check_branch
        %395 = sbr.rel (%p393) target = $region52
      $region51: #{cond_head_forward.1} parent=11 // pred_region
        _
      $region52: #{cond_head_forward.1} parent=11 // pred_fallthru
        _
      // Predicated region
      $region53: #{cond_head_forward.1} parent=11 // pred_check
        %p396 = pneg %p278
      $region54: #{cond_head_forward.1} parent=11 // pred_check_branch
        %398 = sbr.rel (%p396) target = $region56
      $region55: #{cond_head_forward.1} parent=11 // pred_region
        _
      $region56: #{cond_head_forward.1} parent=11 // pred_fallthru
        _
      // Predicated region
      $region57: #{cond_head_forward.1} parent=11 // pred_check
        %p399 = pneg %p299
      $region58: #{cond_head_forward.1} parent=11 // pred_check_branch
        %401 = sbr.rel (%p399) target = $region60
      $region59: #{cond_head_forward.1} parent=11 // pred_region
        _
      $region60: #{cond_head_forward.1} parent=11 // pred_fallthru
        _
    $region12: #{cond_head_forward.1} parent=5 // pred_fallthru
      _
    %p402 = scmp.lt.s32.totalorder %s21, 2
    // Predicated region
    $region61: #{cond_head_forward.1} parent=5 // pred_check
      %p403 = pneg %p402
    $region62: #{cond_head_forward.1} parent=5 // pred_check_branch
      %405 = sbr.rel (%p403) target = $region64
    $region63: #{cond_head_forward.1} parent=5 // pred_region
      // Predicated region
      $region65: #{cond_head_forward.1} parent=63 // pred_check
        %p406 = pneg %p41
      $region66: #{cond_head_forward.1} parent=63 // pred_check_branch
        %408 = sbr.rel (%p406) target = $region68
      $region67: #{cond_head_forward.1} parent=63 // pred_region
        %p409 = scmp.lt.s32.totalorder %s21, 1
        %s410 = scalar_select %p409, %s21, 1
        %s411 = smul.addr %s410, 16
        %s412 = smul.addr %s411, 4
        %s413 = scalar_lea.vmem %s0, %s412
      $region68: #{cond_head_forward.1} parent=63 // pred_fallthru
        _
    $region64: #{cond_head_forward.1} parent=5 // pred_fallthru
      _
    %p414 = scmp.le.s32.totalorder 1, %s21
    %p415 = scmp.lt.s32.totalorder %s21, 3
    %p416 = pnand %p414, %p415
    %p417 = pneg %p416
    // Predicated region
    $region69: #{cond_head_forward.1} parent=5 // pred_check
      _
    $region70: #{cond_head_forward.1} parent=5 // pred_check_branch
      %419 = sbr.rel (%p416) target = $region72
    $region71: #{cond_head_forward.1} parent=5 // pred_region
      %s420 = ssub.s32 %s21, 1
      %p421 = scmp.lt.s32.totalorder %s26, 1
      %s422 = scalar_select %p421, %s26, 1
      %s423 = smul.addr %s422, 16
      %s424 = smul.addr %s423, 4
      %s425 = scalar_lea.vmem %s0, %s424
      %p426 = pneg %p47
      %p427 = pneg %p44
      %p428 = pneg %p68
      %p429 = pneg %p65
      %p430 = pneg %p89
      %p431 = pneg %p86
      %p432 = pneg %p110
      %p433 = pneg %p107
      %p434 = pneg %p131
      %p435 = pneg %p128
      %p436 = pneg %p152
      %p437 = pneg %p149
      %p438 = pneg %p173
      %p439 = pneg %p170
      %p440 = pneg %p194
      %p441 = pneg %p191
      %p442 = pneg %p215
      %p443 = pneg %p212
      %p444 = pneg %p236
      %p445 = pneg %p233
      %p446 = pneg %p257
      %p447 = pneg %p254
      %p448 = pneg %p278
      %p449 = pneg %p275
      %p450 = pneg %p299
      %p451 = pneg %p296
      %p452 = pneg %p325
      %p453 = pneg %p322
      %p454 = scmp.lt.s32.totalorder %s26, 1
      %s455 = scalar_select %p454, %s26, 1
      %s456 = smul.addr %s455, 2
      %s457 = smul.addr %s456, 4
      %s458 = scalar_lea.vmem %s13, %s457
      %p459 = pneg %p351
      %p460 = pneg %p348
      %p461 = scmp.lt.s32.totalorder %s26, 1
      %s462 = scalar_select %p461, %s26, 1
      %s463 = smul.addr %s462, 2
      %s464 = smul.addr %s463, 4
      %s465 = scalar_lea.vmem %s14, %s464
      %p466 = scmp.lt.s32.totalorder %s26, 1
      %s467 = scalar_select %p466, %s26, 1
      %s468 = smul.addr %s467, 16
      %s469 = smul.addr %s468, 4
      %s470 = scalar_lea.vmem %s0, %s469
      %p471 = scmp.lt.s32.totalorder %s26, 1
      %s472 = scalar_select %p471, %s26, 1
      %s473 = smul.addr %s472, 2
      %s474 = smul.addr %s473, 4
      %s475 = scalar_lea.vmem %s13, %s474
      %p476 = scmp.lt.s32.totalorder %s26, 1
      %s477 = scalar_select %p476, %s26, 1
      %s478 = smul.addr %s477, 2
      %s479 = smul.addr %s478, 4
      %s480 = scalar_lea.vmem %s14, %s479
      %v482 = vld [vmem:[%s470] sm:$0xff]
      %v483 = vld [vmem:[%s470 + $0x8] sm:$0xff]
      %v484 = vld [vmem:[%s470 + $0x10] sm:$0xff]
      %v485 = vld [vmem:[%s470 + $0x18] sm:$0xff]
      %v486 = vld [vmem:[%s470 + $0x20] sm:$0xff]
      %v487 = vld [vmem:[%s470 + $0x28] sm:$0xff]
      %v488 = vld [vmem:[%s470 + $0x30] sm:$0xff]
      %v489 = vld [vmem:[%s470 + $0x38] sm:$0xff]
      %v490 = vld [vmem:[%s1] sm:$0xf]
      %v491 = vld [vmem:[%s1 + $0x4] sm:$0xf]
      %v492 = vld [vmem:[%s1 + $0x8] sm:$0xf]
      %v493 = vld [vmem:[%s1 + $0xc] sm:$0xf]
      %v494 = vld [vmem:[%s2] sm:$0xff]
      %v495 = vld [vmem:[%s2 + $0x8] sm:$0xff]
      %v496 = vld [vmem:[%s2 + $0x10] sm:$0xff]
      %v497 = vld [vmem:[%s2 + $0x18] sm:$0xff]
      %499 = vset.pattern.permute.xlu0 0
      %500 = vperm.xlu0 %499, %v494
      %v501 = vpop.permute.xlu0 %500
      %504 = vset.pattern.permute.xlu0 0
      %505 = vperm.xlu0 %504, %v495
      %v506 = vpop.permute.xlu0 %505
      %509 = vset.pattern.permute.xlu0 0
      %510 = vperm.xlu0 %509, %v496
      %v511 = vpop.permute.xlu0 %510
      %514 = vset.pattern.permute.xlu0 0
      %515 = vperm.xlu0 %514, %v497
      %v516 = vpop.permute.xlu0 %515
      %v522 = vunpack.c.l.b16 %v490
      %v523 = vunpack.c.l.b16 %v491
      %v524 = vunpack.c.l.b16 %v492
      %v525 = vunpack.c.l.b16 %v493
      %v526 = vpack.c.b16 %v523, %v522
      %v527 = vpack.c.b16 %v525, %v524
      %v536 = vunpack.c.l.b16 %v482
      %v537 = vunpack.c.h.b16 %v482
      %v538 = vunpack.c.l.b16 %v483
      %v539 = vunpack.c.h.b16 %v483
      %v540 = vunpack.c.l.b16 %v484
      %v541 = vunpack.c.h.b16 %v484
      %v542 = vunpack.c.l.b16 %v485
      %v543 = vunpack.c.h.b16 %v485
      %v544 = vunpack.c.l.b16 %v486
      %v545 = vunpack.c.h.b16 %v486
      %v546 = vunpack.c.l.b16 %v487
      %v547 = vunpack.c.h.b16 %v487
      %v548 = vunpack.c.l.b16 %v488
      %v549 = vunpack.c.h.b16 %v488
      %v550 = vunpack.c.l.b16 %v489
      %v551 = vunpack.c.h.b16 %v489
      %v552 = vpack.c.b16 %v538, %v536
      %v553 = vpack.c.b16 %v539, %v537
      %v554 = vpack.c.b16 %v542, %v540
      %v555 = vpack.c.b16 %v543, %v541
      %v556 = vpack.c.b16 %v546, %v544
      %v557 = vpack.c.b16 %v547, %v545
      %v558 = vpack.c.b16 %v550, %v548
      %v559 = vpack.c.b16 %v551, %v549
      %vm568 = vcmask 523264
      %v570 = vsel %vm568, %v526, 0
      %v573 = vsel %vm568, %v527, 0
      %575 = vmatprep.subr.bf16.mxu0 0
      %576 = vmatpush1.bf16.msra.mxu0 0
      %577 = vmatprep.subr.bf16.mxu0 0
      %578 = vmatpush1.bf16.msra.mxu0 0
      %579 = vmatprep.subr.bf16.mxu0 0
      %580 = vmatpush1.bf16.msra.mxu0 0
      %581 = vmatprep.subr.bf16.mxu0 0
      %582 = vmatpush1.bf16.msra.mxu0 0
      %583 = vmatprep.subr.bf16.mxu0 %v559
      %584 = vmatpush1.bf16.msra.mxu0 %v558
      %585 = vmatprep.subr.bf16.mxu0 %v557
      %586 = vmatpush1.bf16.msra.mxu0 %v556
      %587 = vmatprep.subr.bf16.mxu0 %v555
      %588 = vmatpush1.bf16.msra.mxu0 %v554
      %589 = vmatprep.subr.bf16.mxu0 %v553
      %590 = vmatpush1.bf16.msra.mxu0 %v552
      %591 = vmatprep.subr.bf16.mxu0 0
      %592 = vmatpush2.bf16.msra.mxu0 0
      %593 = vmatprep.subr.bf16.mxu0 0
      %594 = vmatpush2.bf16.msra.mxu0 0
      %595 = vmatprep.subr.bf16.mxu0 0
      %596 = vmatpush2.bf16.msra.mxu0 0
      %597 = vmatprep.subr.bf16.mxu0 0
      %598 = vmatpush2.bf16.msra.mxu0 0
      %599 = vmatprep.subr.bf16.mxu0 0
      %600 = vmatpush2.bf16.msra.mxu0 0
      %601 = vmatprep.subr.bf16.mxu0 0
      %602 = vmatpush2.bf16.msra.mxu0 0
      %603 = vmatprep.subr.bf16.mxu0 0
      %604 = vmatpush2.bf16.msra.mxu0 0
      %605 = vmatprep.subr.bf16.mxu0 0
      %606 = vmatpush2.bf16.msra.mxu0 0
      %607 = vmatprep.mubr.bf16.mxu0 0
      %608 = vmatmul.mubr.bf16.gmra.mxu0 %v570
      %v609 = vpop.f32.mrf.mxu0
      %v610 = vadd.f32 %v501, %v609
      %v611 = vpop.f32.mrf.mxu0
      %v612 = vadd.f32 %v501, %v611
      %v613 = vpop.f32.mrf.mxu0
      %v614 = vadd.f32 %v506, %v613
      %v615 = vpop.f32.mrf.mxu0
      %v616 = vadd.f32 %v506, %v615
      %617 = vmatprep.mubr.bf16.mxu0 0
      %618 = vmatmul.mubr.bf16.gmra.mxu0 %v573
      %v619 = vpop.f32.mrf.mxu0
      %v620 = vadd.f32 %v511, %v619
      %v621 = vpop.f32.mrf.mxu0
      %v622 = vadd.f32 %v511, %v621
      %v623 = vpop.f32.mrf.mxu0
      %v624 = vadd.f32 %v516, %v623
      %v625 = vpop.f32.mrf.mxu0
      %v626 = vadd.f32 %v516, %v625
      %627 = vdwg.mxu0
      %v628 = vmax.f32 %v610, 0.0
      %v629 = vmax.f32 %v612, 0.0
      %v630 = vmax.f32 %v614, 0.0
      %v631 = vmax.f32 %v616, 0.0
      %v632 = vmax.f32 %v620, 0.0
      %v633 = vmax.f32 %v622, 0.0
      %v634 = vmax.f32 %v624, 0.0
      %v635 = vmax.f32 %v626, 0.0
      %v636 = vpack.c.bf16 %v630, %v628
      %v637 = vpack.c.bf16 %v631, %v629
      %v638 = vpack.c.bf16 %v634, %v632
      %v639 = vpack.c.bf16 %v635, %v633
      %v640 = vld [vmem:[%s3] sm:$0x7]
      %v641 = vld [vmem:[%s4] sm:$0x1f]
      %643 = vset.pattern.permute.xlu0 0
      %644 = vperm.xlu0 %643, %v641
      %v645 = vpop.permute.xlu0 %644
      %vm647 = vcmask 261120
      %v649 = vsel %vm647, %v640, 0
      %651 = vmatprep.subr.bf16.mxu0 0
      %652 = vmatpush1.bf16.msra.mxu0 0
      %653 = vmatprep.subr.bf16.mxu0 0
      %654 = vmatpush1.bf16.msra.mxu0 0
      %655 = vmatprep.subr.bf16.mxu0 0
      %656 = vmatpush1.bf16.msra.mxu0 0
      %657 = vmatprep.subr.bf16.mxu0 0
      %658 = vmatpush1.bf16.msra.mxu0 0
      %659 = vmatprep.subr.bf16.mxu0 0
      %660 = vmatpush1.bf16.msra.mxu0 0
      %661 = vmatprep.subr.bf16.mxu0 0
      %662 = vmatpush1.bf16.msra.mxu0 0
      %663 = vmatprep.subr.bf16.mxu0 %v639
      %664 = vmatpush1.bf16.msra.mxu0 %v638
      %665 = vmatprep.subr.bf16.mxu0 %v637
      %666 = vmatpush1.bf16.msra.mxu0 %v636
      %667 = vmatprep.subr.bf16.mxu0 0
      %668 = vmatpush2.bf16.msra.mxu0 0
      %669 = vmatprep.subr.bf16.mxu0 0
      %670 = vmatpush2.bf16.msra.mxu0 0
      %671 = vmatprep.subr.bf16.mxu0 0
      %672 = vmatpush2.bf16.msra.mxu0 0
      %673 = vmatprep.subr.bf16.mxu0 0
      %674 = vmatpush2.bf16.msra.mxu0 0
      %675 = vmatprep.subr.bf16.mxu0 0
      %676 = vmatpush2.bf16.msra.mxu0 0
      %677 = vmatprep.subr.bf16.mxu0 0
      %678 = vmatpush2.bf16.msra.mxu0 0
      %679 = vmatprep.subr.bf16.mxu0 0
      %680 = vmatpush2.bf16.msra.mxu0 0
      %681 = vmatprep.subr.bf16.mxu0 0
      %682 = vmatpush2.bf16.msra.mxu0 0
      %683 = vmatprep.mubr.bf16.mxu0 0
      %684 = vmatmul.mubr.bf16.gmra.mxu0 %v649
      %v685 = vpop.f32.mrf.mxu0
      %v686 = vadd.f32 %v645, %v685
      %v687 = vpop.f32.mrf.mxu0
      %v688 = vadd.f32 %v645, %v687
      %v689 = vpop.f32.mrf.mxu0
      %v690 = vpop.f32.mrf.mxu0
      %691 = vdwg.mxu0
      %v692 = vpack.c.bf16 %v686, %v686
      %v693 = vpack.c.bf16 %v688, %v688
      %v696 = vunpack.c.l.b16 %v692
      %v697 = vunpack.c.l.b16 %v693
      %v698 = vpack.c.b16 %v697, %v696
      %vm700 = vcmask 1042432
      %vm701 = vsmask.f32 2304
      %vm702 = vmand %vm700, %vm701
      %vm703 = vcmask 1046532
      %vm704 = vsmask.f32 6400
      %vm705 = vmand %vm703, %vm704
      %vm706 = vmor %vm705, %vm702
      %v707 = vld [vmem:[%s475] sm:$0x77]
      %v708 = vsel %vm706, %v698, %v707
      %709 = vst [vmem:[%s475] sm:$0x77] %v708
      %vm710 = vcmask 1044480
      %v711 = vsel %vm710, %v686, -inf
      %v712 = vrot.slane %v711, 4
      %v713 = vmax.f32 %v711, %v712
      %v714 = vrot.slane %v713, 2
      %v715 = vmax.f32 %v713, %v714
      %v716 = vrot.slane %v715, 1
      %v717 = vmax.f32 %v715, %v716
      %v718 = vsel %vm710, %v688, -inf
      %v719 = vrot.slane %v718, 4
      %v720 = vmax.f32 %v718, %v719
      %v721 = vrot.slane %v720, 2
      %v722 = vmax.f32 %v720, %v721
      %v723 = vrot.slane %v722, 1
      %v724 = vmax.f32 %v722, %v723
      %v725 = vsub.f32 %v686, %v717
      %v726 = vsub.f32 %v688, %v724
      %v727 = vmul.f32 %v725, 1.442695
      %v728 = vpow.pop %v727
      %v729 = vmul.f32 %v726, 1.442695
      %v730 = vpow.pop %v729
      %v731 = vsel %vm710, %v728, 0.0
      %v732 = vrot.slane %v731, 4
      %v733 = vadd.f32 %v731, %v732
      %v734 = vrot.slane %v733, 2
      %v735 = vadd.f32 %v733, %v734
      %v736 = vrot.slane %v735, 1
      %v737 = vadd.f32 %v735, %v736
      %v738 = vsel %vm710, %v730, 0.0
      %v739 = vrot.slane %v738, 4
      %v740 = vadd.f32 %v738, %v739
      %v741 = vrot.slane %v740, 2
      %v742 = vadd.f32 %v740, %v741
      %v743 = vrot.slane %v742, 1
      %v744 = vadd.f32 %v742, %v743
      %v745 = vrcp.pop %v737
      %v746 = vrcp.pop %v744
      %v747 = vmul.f32 %v728, %v745
      %v748 = vmul.f32 %v730, %v746
      %v749 = vpack.c.bf16 %v747, %v747
      %v750 = vpack.c.bf16 %v748, %v748
      %751 = vmatprep.subr.bf16.mxu0 0
      %752 = vmatpush1.bf16.xpose.msra.mxu0 0
      %753 = vmatprep.subr.bf16.mxu0 0
      %754 = vmatpush1.bf16.xpose.msra.mxu0 0
      %755 = vmatprep.subr.bf16.mxu0 0
      %756 = vmatpush1.bf16.xpose.msra.mxu0 0
      %757 = vmatprep.subr.bf16.mxu0 0
      %758 = vmatpush1.bf16.xpose.msra.mxu0 0
      %759 = vmatprep.subr.bf16.mxu0 0
      %760 = vmatpush1.bf16.xpose.msra.mxu0 0
      %761 = vmatprep.subr.bf16.mxu0 0
      %762 = vmatpush1.bf16.xpose.msra.mxu0 0
      %763 = vmatprep.subr.bf16.mxu0 %v639
      %764 = vmatpush1.bf16.xpose.msra.mxu0 %v638
      %765 = vmatprep.subr.bf16.mxu0 %v637
      %766 = vmatpush1.bf16.xpose.msra.mxu0 %v636
      %767 = vmatprep.subr.bf16.mxu0 0
      %768 = vmatpush2.bf16.xpose.msra.mxu0 0
      %769 = vmatprep.subr.bf16.mxu0 0
      %770 = vmatpush2.bf16.xpose.msra.mxu0 0
      %771 = vmatprep.subr.bf16.mxu0 0
      %772 = vmatpush2.bf16.xpose.msra.mxu0 0
      %773 = vmatprep.subr.bf16.mxu0 0
      %774 = vmatpush2.bf16.xpose.msra.mxu0 0
      %775 = vmatprep.subr.bf16.mxu0 0
      %776 = vmatpush2.bf16.xpose.msra.mxu0 0
      %777 = vmatprep.subr.bf16.mxu0 0
      %778 = vmatpush2.bf16.xpose.msra.mxu0 0
      %779 = vmatprep.subr.bf16.mxu0 0
      %780 = vmatpush2.bf16.xpose.msra.mxu0 0
      %781 = vmatprep.subr.bf16.mxu0 0
      %782 = vmatpush2.bf16.xpose.msra.mxu0 0
      %783 = vmatprep.mubr.bf16.mxu0 %v750
      %784 = vmatmul.mubr.bf16.gmra.mxu0 %v749
      %v785 = vpop.f32.mrf.mxu0
      %v786 = vadd.f32 0.0, %v785
      %v787 = vpop.f32.mrf.mxu0
      %v788 = vpop.f32.mrf.mxu0
      %v789 = vpop.f32.mrf.mxu0
      %790 = vdwg.mxu0
      %v791 = vmul.f32 %v786, 0.00390625
      %v792 = vld [vmem:[%s10] sm:$0x1f]
      %vm793 = vcmask 39936
      %v795 = vsel %vm793, %v792, 0
      %v798 = vsel %vm710, %v791, 0
      %800 = vmatprep.subr.mxu0 0.0
      %801 = vmatpush1.msra.mxu0 0.0
      %802 = vmatprep.subr.mxu0 0.0
      %803 = vmatpush1.msra.mxu0 0.0
      %804 = vmatprep.subr.mxu0 0.0
      %805 = vmatpush1.msra.mxu0 0.0
      %806 = vmatprep.subr.mxu0 0.0
      %807 = vmatpush1.msra.mxu0 0.0
      %808 = vmatprep.subr.mxu0 0.0
      %809 = vmatpush1.msra.mxu0 0.0
      %810 = vmatprep.subr.mxu0 0.0
      %811 = vmatpush1.msra.mxu0 0.0
      %812 = vmatprep.subr.mxu0 0.0
      %813 = vmatpush1.msra.mxu0 0.0
      %814 = vmatprep.subr.mxu0 0.0
      %815 = vmatpush1.msra.mxu0 0.0
      %816 = vmatprep.subr.mxu0 0.0
      %817 = vmatpush1.msra.mxu0 0.0
      %818 = vmatprep.subr.mxu0 0.0
      %819 = vmatpush1.msra.mxu0 0.0
      %820 = vmatprep.subr.mxu0 0.0
      %821 = vmatpush1.msra.mxu0 0.0
      %822 = vmatprep.subr.mxu0 0.0
      %823 = vmatpush1.msra.mxu0 0.0
      %824 = vmatprep.subr.mxu0 0.0
      %825 = vmatpush1.msra.mxu0 0.0
      %826 = vmatprep.subr.mxu0 0.0
      %827 = vmatpush1.msra.mxu0 0.0
      %828 = vmatprep.subr.mxu0 0.0
      %829 = vmatpush1.msra.mxu0 0.0
      %830 = vmatprep.subr.mxu0 0.0
      %831 = vmatpush1.msra.mxu0 %v798
      %832 = vmatprep.subr.mxu0 0.0
      %833 = vmatpush2.msra.mxu0 0.0
      %834 = vmatprep.subr.mxu0 0.0
      %835 = vmatpush2.msra.mxu0 0.0
      %836 = vmatprep.subr.mxu0 0.0
      %837 = vmatpush2.msra.mxu0 0.0
      %838 = vmatprep.subr.mxu0 0.0
      %839 = vmatpush2.msra.mxu0 0.0
      %840 = vmatprep.subr.mxu0 0.0
      %841 = vmatpush2.msra.mxu0 0.0
      %842 = vmatprep.subr.mxu0 0.0
      %843 = vmatpush2.msra.mxu0 0.0
      %844 = vmatprep.subr.mxu0 0.0
      %845 = vmatpush2.msra.mxu0 0.0
      %846 = vmatprep.subr.mxu0 0.0
      %847 = vmatpush2.msra.mxu0 0.0
      %848 = vmatprep.subr.mxu0 0.0
      %849 = vmatpush2.msra.mxu0 0.0
      %850 = vmatprep.subr.mxu0 0.0
      %851 = vmatpush2.msra.mxu0 0.0
      %852 = vmatprep.subr.mxu0 0.0
      %853 = vmatpush2.msra.mxu0 0.0
      %854 = vmatprep.subr.mxu0 0.0
      %855 = vmatpush2.msra.mxu0 0.0
      %856 = vmatprep.subr.mxu0 0.0
      %857 = vmatpush2.msra.mxu0 0.0
      %858 = vmatprep.subr.mxu0 0.0
      %859 = vmatpush2.msra.mxu0 0.0
      %860 = vmatprep.subr.mxu0 0.0
      %861 = vmatpush2.msra.mxu0 0.0
      %862 = vmatprep.subr.mxu0 0.0
      %863 = vmatpush2.msra.mxu0 0.0
      %864 = vmatprep.mubr.f32.mxu0 0.0
      %865 = vmatmul.mubr.f32.gmra.mxu0 %v795
      %v866 = vpop.f32.mrf.mxu0
      %v867 = vadd.f32 0.0, %v866
      %v868 = vpop.f32.mrf.mxu0
      %869 = vdwg.mxu0
      %v870 = vld [vmem:[%s11] sm:$0x1f]
      %v872 = vsel %vm793, %v870, 0
      %874 = vmatprep.subr.mxu0 0.0
      %875 = vmatpush1.msra.mxu0 0.0
      %876 = vmatprep.subr.mxu0 0.0
      %877 = vmatpush1.msra.mxu0 0.0
      %878 = vmatprep.subr.mxu0 0.0
      %879 = vmatpush1.msra.mxu0 0.0
      %880 = vmatprep.subr.mxu0 0.0
      %881 = vmatpush1.msra.mxu0 0.0
      %882 = vmatprep.subr.mxu0 0.0
      %883 = vmatpush1.msra.mxu0 0.0
      %884 = vmatprep.subr.mxu0 0.0
      %885 = vmatpush1.msra.mxu0 0.0
      %886 = vmatprep.subr.mxu0 0.0
      %887 = vmatpush1.msra.mxu0 0.0
      %888 = vmatprep.subr.mxu0 0.0
      %889 = vmatpush1.msra.mxu0 0.0
      %890 = vmatprep.subr.mxu0 0.0
      %891 = vmatpush1.msra.mxu0 0.0
      %892 = vmatprep.subr.mxu0 0.0
      %893 = vmatpush1.msra.mxu0 0.0
      %894 = vmatprep.subr.mxu0 0.0
      %895 = vmatpush1.msra.mxu0 0.0
      %896 = vmatprep.subr.mxu0 0.0
      %897 = vmatpush1.msra.mxu0 0.0
      %898 = vmatprep.subr.mxu0 0.0
      %899 = vmatpush1.msra.mxu0 0.0
      %900 = vmatprep.subr.mxu0 0.0
      %901 = vmatpush1.msra.mxu0 0.0
      %902 = vmatprep.subr.mxu0 0.0
      %903 = vmatpush1.msra.mxu0 0.0
      %904 = vmatprep.subr.mxu0 0.0
      %905 = vmatpush1.msra.mxu0 %v798
      %906 = vmatprep.subr.mxu0 0.0
      %907 = vmatpush2.msra.mxu0 0.0
      %908 = vmatprep.subr.mxu0 0.0
      %909 = vmatpush2.msra.mxu0 0.0
      %910 = vmatprep.subr.mxu0 0.0
      %911 = vmatpush2.msra.mxu0 0.0
      %912 = vmatprep.subr.mxu0 0.0
      %913 = vmatpush2.msra.mxu0 0.0
      %914 = vmatprep.subr.mxu0 0.0
      %915 = vmatpush2.msra.mxu0 0.0
      %916 = vmatprep.subr.mxu0 0.0
      %917 = vmatpush2.msra.mxu0 0.0
      %918 = vmatprep.subr.mxu0 0.0
      %919 = vmatpush2.msra.mxu0 0.0
      %920 = vmatprep.subr.mxu0 0.0
      %921 = vmatpush2.msra.mxu0 0.0
      %922 = vmatprep.subr.mxu0 0.0
      %923 = vmatpush2.msra.mxu0 0.0
      %924 = vmatprep.subr.mxu0 0.0
      %925 = vmatpush2.msra.mxu0 0.0
      %926 = vmatprep.subr.mxu0 0.0
      %927 = vmatpush2.msra.mxu0 0.0
      %928 = vmatprep.subr.mxu0 0.0
      %929 = vmatpush2.msra.mxu0 0.0
      %930 = vmatprep.subr.mxu0 0.0
      %931 = vmatpush2.msra.mxu0 0.0
      %932 = vmatprep.subr.mxu0 0.0
      %933 = vmatpush2.msra.mxu0 0.0
      %934 = vmatprep.subr.mxu0 0.0
      %935 = vmatpush2.msra.mxu0 0.0
      %936 = vmatprep.subr.mxu0 0.0
      %937 = vmatpush2.msra.mxu0 0.0
      %938 = vmatprep.mubr.f32.mxu0 0.0
      %939 = vmatmul.mubr.f32.gmra.mxu0 %v872
      %v940 = vpop.f32.mrf.mxu0
      %v941 = vadd.f32 0.0, %v940
      %v942 = vpop.f32.mrf.mxu0
      %943 = vdwg.mxu0
      %v944 = vld [vmem:[%s12] sm:$0x1f]
      %v946 = vsel %vm793, %v944, 0
      %948 = vmatprep.subr.mxu0 0.0
      %949 = vmatpush1.msra.mxu0 0.0
      %950 = vmatprep.subr.mxu0 0.0
      %951 = vmatpush1.msra.mxu0 0.0
      %952 = vmatprep.subr.mxu0 0.0
      %953 = vmatpush1.msra.mxu0 0.0
      %954 = vmatprep.subr.mxu0 0.0
      %955 = vmatpush1.msra.mxu0 0.0
      %956 = vmatprep.subr.mxu0 0.0
      %957 = vmatpush1.msra.mxu0 0.0
      %958 = vmatprep.subr.mxu0 0.0
      %959 = vmatpush1.msra.mxu0 0.0
      %960 = vmatprep.subr.mxu0 0.0
      %961 = vmatpush1.msra.mxu0 0.0
      %962 = vmatprep.subr.mxu0 0.0
      %963 = vmatpush1.msra.mxu0 0.0
      %964 = vmatprep.subr.mxu0 0.0
      %965 = vmatpush1.msra.mxu0 0.0
      %966 = vmatprep.subr.mxu0 0.0
      %967 = vmatpush1.msra.mxu0 0.0
      %968 = vmatprep.subr.mxu0 0.0
      %969 = vmatpush1.msra.mxu0 0.0
      %970 = vmatprep.subr.mxu0 0.0
      %971 = vmatpush1.msra.mxu0 0.0
      %972 = vmatprep.subr.mxu0 0.0
      %973 = vmatpush1.msra.mxu0 0.0
      %974 = vmatprep.subr.mxu0 0.0
      %975 = vmatpush1.msra.mxu0 0.0
      %976 = vmatprep.subr.mxu0 0.0
      %977 = vmatpush1.msra.mxu0 0.0
      %978 = vmatprep.subr.mxu0 0.0
      %979 = vmatpush1.msra.mxu0 %v798
      %980 = vmatprep.subr.mxu0 0.0
      %981 = vmatpush2.msra.mxu0 0.0
      %982 = vmatprep.subr.mxu0 0.0
      %983 = vmatpush2.msra.mxu0 0.0
      %984 = vmatprep.subr.mxu0 0.0
      %985 = vmatpush2.msra.mxu0 0.0
      %986 = vmatprep.subr.mxu0 0.0
      %987 = vmatpush2.msra.mxu0 0.0
      %988 = vmatprep.subr.mxu0 0.0
      %989 = vmatpush2.msra.mxu0 0.0
      %990 = vmatprep.subr.mxu0 0.0
      %991 = vmatpush2.msra.mxu0 0.0
      %992 = vmatprep.subr.mxu0 0.0
      %993 = vmatpush2.msra.mxu0 0.0
      %994 = vmatprep.subr.mxu0 0.0
      %995 = vmatpush2.msra.mxu0 0.0
      %996 = vmatprep.subr.mxu0 0.0
      %997 = vmatpush2.msra.mxu0 0.0
      %998 = vmatprep.subr.mxu0 0.0
      %999 = vmatpush2.msra.mxu0 0.0
      %1000 = vmatprep.subr.mxu0 0.0
      %1001 = vmatpush2.msra.mxu0 0.0
      %1002 = vmatprep.subr.mxu0 0.0
      %1003 = vmatpush2.msra.mxu0 0.0
      %1004 = vmatprep.subr.mxu0 0.0
      %1005 = vmatpush2.msra.mxu0 0.0
      %1006 = vmatprep.subr.mxu0 0.0
      %1007 = vmatpush2.msra.mxu0 0.0
      %1008 = vmatprep.subr.mxu0 0.0
      %1009 = vmatpush2.msra.mxu0 0.0
      %1010 = vmatprep.subr.mxu0 0.0
      %1011 = vmatpush2.msra.mxu0 0.0
      %1012 = vmatprep.mubr.f32.mxu0 0.0
      %1013 = vmatmul.mubr.f32.gmra.mxu0 %v946
      %v1014 = vpop.f32.mrf.mxu0
      %v1015 = vadd.f32 0.0, %v1014
      %v1016 = vpop.f32.mrf.mxu0
      %1017 = vdwg.mxu0
      %v1018 = vld [vmem:[%s5] sm:$0xff]
      %v1019 = vld [vmem:[%s5 + $0x8] sm:$0xff]
      %v1020 = vld [vmem:[%s5 + $0x10] sm:$0xff]
      %v1021 = vld [vmem:[%s5 + $0x18] sm:$0xff]
      %v1022 = vld [vmem:[%s5 + $0x20] sm:$0xff]
      %v1023 = vld [vmem:[%s5 + $0x28] sm:$0xff]
      %v1024 = vld [vmem:[%s5 + $0x30] sm:$0xff]
      %v1025 = vld [vmem:[%s5 + $0x38] sm:$0xff]
      %v1026 = vld [vmem:[%s5 + $0x40] sm:$0xff]
      %v1027 = vld [vmem:[%s5 + $0x48] sm:$0xff]
      %v1028 = vld [vmem:[%s5 + $0x50] sm:$0xff]
      %v1029 = vld [vmem:[%s5 + $0x58] sm:$0xff]
      %v1030 = vld [vmem:[%s5 + $0x60] sm:$0xff]
      %v1031 = vld [vmem:[%s5 + $0x68] sm:$0xff]
      %v1032 = vld [vmem:[%s5 + $0x70] sm:$0xff]
      %v1033 = vld [vmem:[%s5 + $0x78] sm:$0xff]
      %v1034 = vld [vmem:[%s5 + $0x80] sm:$0xff]
      %v1035 = vld [vmem:[%s5 + $0x88] sm:$0xff]
      %v1036 = vld [vmem:[%s5 + $0x90] sm:$0xff]
      %v1037 = vld [vmem:[%s5 + $0x98] sm:$0xff]
      %v1039 = vcombine.high %v867, %v867
      %v1041 = vunpack.c.l.s4 1966171168
      %v1042 = vunpack.c.0.s8 %v1041
      %v1043 = vlaneseq
      %v1044 = vshrl.u32 %v1043, 7
      %v1045 = vsub.s32 %v1042, %v1044
      %v1046 = vrot.slane %v867, %v1045
      %v1048 = vunpack.c.l.s4 1966171168
      %v1049 = vunpack.c.0.s8 %v1048
      %v1050 = vlaneseq
      %v1051 = vshrl.u32 %v1050, 7
      %v1052 = vsub.s32 %v1049, %v1051
      %v1053 = vrot.slane %v1039, %v1052
      %v1054 = vcombine.high %v1046, %v1046
      %v1056 = vunpack.c.l.s4 1966171168
      %v1057 = vunpack.c.0.s8 %v1056
      %v1058 = vlaneseq
      %v1059 = vshrl.u32 %v1058, 7
      %v1060 = vsub.s32 %v1057, %v1059
      %v1061 = vrot.slane %v1046, %v1060
      %v1063 = vunpack.c.l.s4 1966171168
      %v1064 = vunpack.c.0.s8 %v1063
      %v1065 = vlaneseq
      %v1066 = vshrl.u32 %v1065, 7
      %v1067 = vsub.s32 %v1064, %v1066
      %v1068 = vrot.slane %v1053, %v1067
      %v1070 = vunpack.c.l.s4 1966171168
      %v1071 = vunpack.c.0.s8 %v1070
      %v1072 = vlaneseq
      %v1073 = vshrl.u32 %v1072, 7
      %v1074 = vsub.s32 %v1071, %v1073
      %v1075 = vrot.slane %v1054, %v1074
      %v1076 = vcombine.high %v1061, %v1061
      %v1077 = vcombine.high %v1075, %v1075
      %v1078 = vlaneseq
      %v1079 = vshrl.u32 %v1078, 7
      %v1080 = vsub.s32 0, %v1079
      %v1081 = vrot.slane %v1061, %v1080
      %v1082 = vlaneseq
      %v1083 = vshrl.u32 %v1082, 7
      %v1084 = vsub.s32 0, %v1083
      %v1085 = vrot.slane %v1075, %v1084
      %v1086 = vlaneseq
      %v1087 = vshrl.u32 %v1086, 7
      %v1088 = vsub.s32 0, %v1087
      %v1089 = vrot.slane %v1076, %v1088
      %v1090 = vlaneseq
      %v1091 = vshrl.u32 %v1090, 7
      %v1092 = vsub.s32 0, %v1091
      %v1093 = vrot.slane %v1077, %v1092
      %v1094 = vlaneseq
      %v1095 = vshrl.u32 %v1094, 7
      %v1096 = vsub.s32 0, %v1095
      %v1097 = vrot.slane %v1068, %v1096
      %v1103 = vmul.f32 %v1018, %v1081
      %v1104 = vmul.f32 %v1019, %v1081
      %v1105 = vmul.f32 %v1020, %v1081
      %v1106 = vmul.f32 %v1021, %v1081
      %v1107 = vmul.f32 %v1022, %v1085
      %v1108 = vmul.f32 %v1023, %v1085
      %v1109 = vmul.f32 %v1024, %v1085
      %v1110 = vmul.f32 %v1025, %v1085
      %v1111 = vmul.f32 %v1026, %v1089
      %v1112 = vmul.f32 %v1027, %v1089
      %v1113 = vmul.f32 %v1028, %v1089
      %v1114 = vmul.f32 %v1029, %v1089
      %v1115 = vmul.f32 %v1030, %v1093
      %v1116 = vmul.f32 %v1031, %v1093
      %v1117 = vmul.f32 %v1032, %v1093
      %v1118 = vmul.f32 %v1033, %v1093
      %v1119 = vmul.f32 %v1034, %v1097
      %v1120 = vmul.f32 %v1035, %v1097
      %v1121 = vmul.f32 %v1036, %v1097
      %v1122 = vmul.f32 %v1037, %v1097
      %v1123 = vsel %vm647, %v1103, 0.0
      %1124 = vadd.xlane.f32.xlu0 %v1123
      %v1125 = vpop.xlane.xlu0 %1124
      %v1126 = vsel %vm647, %v1104, 0.0
      %1127 = vadd.xlane.f32.xlu0 %v1126
      %v1128 = vpop.xlane.xlu0 %1127
      %v1129 = vsel %vm647, %v1105, 0.0
      %1130 = vadd.xlane.f32.xlu0 %v1129
      %v1131 = vpop.xlane.xlu0 %1130
      %v1132 = vsel %vm647, %v1106, 0.0
      %1133 = vadd.xlane.f32.xlu0 %v1132
      %v1134 = vpop.xlane.xlu0 %1133
      %v1135 = vsel %vm647, %v1107, 0.0
      %1136 = vadd.xlane.f32.xlu0 %v1135
      %v1137 = vpop.xlane.xlu0 %1136
      %v1138 = vsel %vm647, %v1108, 0.0
      %1139 = vadd.xlane.f32.xlu0 %v1138
      %v1140 = vpop.xlane.xlu0 %1139
      %v1141 = vsel %vm647, %v1109, 0.0
      %1142 = vadd.xlane.f32.xlu0 %v1141
      %v1143 = vpop.xlane.xlu0 %1142
      %v1144 = vsel %vm647, %v1110, 0.0
      %1145 = vadd.xlane.f32.xlu0 %v1144
      %v1146 = vpop.xlane.xlu0 %1145
      %v1147 = vsel %vm647, %v1111, 0.0
      %1148 = vadd.xlane.f32.xlu0 %v1147
      %v1149 = vpop.xlane.xlu0 %1148
      %v1150 = vsel %vm647, %v1112, 0.0
      %1151 = vadd.xlane.f32.xlu0 %v1150
      %v1152 = vpop.xlane.xlu0 %1151
      %v1153 = vsel %vm647, %v1113, 0.0
      %1154 = vadd.xlane.f32.xlu0 %v1153
      %v1155 = vpop.xlane.xlu0 %1154
      %v1156 = vsel %vm647, %v1114, 0.0
      %1157 = vadd.xlane.f32.xlu0 %v1156
      %v1158 = vpop.xlane.xlu0 %1157
      %v1159 = vsel %vm647, %v1115, 0.0
      %1160 = vadd.xlane.f32.xlu0 %v1159
      %v1161 = vpop.xlane.xlu0 %1160
      %v1162 = vsel %vm647, %v1116, 0.0
      %1163 = vadd.xlane.f32.xlu0 %v1162
      %v1164 = vpop.xlane.xlu0 %1163
      %v1165 = vsel %vm647, %v1117, 0.0
      %1166 = vadd.xlane.f32.xlu0 %v1165
      %v1167 = vpop.xlane.xlu0 %1166
      %v1168 = vsel %vm647, %v1118, 0.0
      %1169 = vadd.xlane.f32.xlu0 %v1168
      %v1170 = vpop.xlane.xlu0 %1169
      %v1171 = vsel %vm647, %v1119, 0.0
      %1172 = vadd.xlane.f32.xlu0 %v1171
      %v1173 = vpop.xlane.xlu0 %1172
      %v1174 = vsel %vm647, %v1120, 0.0
      %1175 = vadd.xlane.f32.xlu0 %v1174
      %v1176 = vpop.xlane.xlu0 %1175
      %v1177 = vsel %vm647, %v1121, 0.0
      %1178 = vadd.xlane.f32.xlu0 %v1177
      %v1179 = vpop.xlane.xlu0 %1178
      %v1180 = vsel %vm647, %v1122, 0.0
      %1181 = vadd.xlane.f32.xlu0 %v1180
      %v1182 = vpop.xlane.xlu0 %1181
      %v1183 = vld [vmem:[%s6] sm:$0xff]
      %v1184 = vld [vmem:[%s6 + $0x8] sm:$0xff]
      %v1185 = vld [vmem:[%s6 + $0x10] sm:$0xff]
      %v1186 = vld [vmem:[%s6 + $0x18] sm:$0xff]
      %v1187 = vld [vmem:[%s6 + $0x20] sm:$0xff]
      %v1188 = vld [vmem:[%s6 + $0x28] sm:$0xff]
      %v1189 = vld [vmem:[%s6 + $0x30] sm:$0xff]
      %v1190 = vld [vmem:[%s6 + $0x38] sm:$0xff]
      %v1191 = vld [vmem:[%s6 + $0x40] sm:$0xff]
      %v1192 = vld [vmem:[%s6 + $0x48] sm:$0xff]
      %v1193 = vld [vmem:[%s6 + $0x50] sm:$0xff]
      %v1194 = vld [vmem:[%s6 + $0x58] sm:$0xff]
      %v1195 = vld [vmem:[%s6 + $0x60] sm:$0xff]
      %v1196 = vld [vmem:[%s6 + $0x68] sm:$0xff]
      %v1197 = vld [vmem:[%s6 + $0x70] sm:$0xff]
      %v1198 = vld [vmem:[%s6 + $0x78] sm:$0xff]
      %v1199 = vld [vmem:[%s6 + $0x80] sm:$0xff]
      %v1200 = vld [vmem:[%s6 + $0x88] sm:$0xff]
      %v1201 = vld [vmem:[%s6 + $0x90] sm:$0xff]
      %v1202 = vld [vmem:[%s6 + $0x98] sm:$0xff]
      %v1204 = vcombine.high %v941, %v941
      %v1206 = vunpack.c.l.s4 1966171168
      %v1207 = vunpack.c.0.s8 %v1206
      %v1208 = vlaneseq
      %v1209 = vshrl.u32 %v1208, 7
      %v1210 = vsub.s32 %v1207, %v1209
      %v1211 = vrot.slane %v941, %v1210
      %v1213 = vunpack.c.l.s4 1966171168
      %v1214 = vunpack.c.0.s8 %v1213
      %v1215 = vlaneseq
      %v1216 = vshrl.u32 %v1215, 7
      %v1217 = vsub.s32 %v1214, %v1216
      %v1218 = vrot.slane %v1204, %v1217
      %v1219 = vcombine.high %v1211, %v1211
      %v1221 = vunpack.c.l.s4 1966171168
      %v1222 = vunpack.c.0.s8 %v1221
      %v1223 = vlaneseq
      %v1224 = vshrl.u32 %v1223, 7
      %v1225 = vsub.s32 %v1222, %v1224
      %v1226 = vrot.slane %v1211, %v1225
      %v1228 = vunpack.c.l.s4 1966171168
      %v1229 = vunpack.c.0.s8 %v1228
      %v1230 = vlaneseq
      %v1231 = vshrl.u32 %v1230, 7
      %v1232 = vsub.s32 %v1229, %v1231
      %v1233 = vrot.slane %v1218, %v1232
      %v1235 = vunpack.c.l.s4 1966171168
      %v1236 = vunpack.c.0.s8 %v1235
      %v1237 = vlaneseq
      %v1238 = vshrl.u32 %v1237, 7
      %v1239 = vsub.s32 %v1236, %v1238
      %v1240 = vrot.slane %v1219, %v1239
      %v1241 = vcombine.high %v1226, %v1226
      %v1242 = vcombine.high %v1240, %v1240
      %v1243 = vlaneseq
      %v1244 = vshrl.u32 %v1243, 7
      %v1245 = vsub.s32 0, %v1244
      %v1246 = vrot.slane %v1226, %v1245
      %v1247 = vlaneseq
      %v1248 = vshrl.u32 %v1247, 7
      %v1249 = vsub.s32 0, %v1248
      %v1250 = vrot.slane %v1240, %v1249
      %v1251 = vlaneseq
      %v1252 = vshrl.u32 %v1251, 7
      %v1253 = vsub.s32 0, %v1252
      %v1254 = vrot.slane %v1241, %v1253
      %v1255 = vlaneseq
      %v1256 = vshrl.u32 %v1255, 7
      %v1257 = vsub.s32 0, %v1256
      %v1258 = vrot.slane %v1242, %v1257
      %v1259 = vlaneseq
      %v1260 = vshrl.u32 %v1259, 7
      %v1261 = vsub.s32 0, %v1260
      %v1262 = vrot.slane %v1233, %v1261
      %v1268 = vmul.f32 %v1183, %v1246
      %v1269 = vmul.f32 %v1184, %v1246
      %v1270 = vmul.f32 %v1185, %v1246
      %v1271 = vmul.f32 %v1186, %v1246
      %v1272 = vmul.f32 %v1187, %v1250
      %v1273 = vmul.f32 %v1188, %v1250
      %v1274 = vmul.f32 %v1189, %v1250
      %v1275 = vmul.f32 %v1190, %v1250
      %v1276 = vmul.f32 %v1191, %v1254
      %v1277 = vmul.f32 %v1192, %v1254
      %v1278 = vmul.f32 %v1193, %v1254
      %v1279 = vmul.f32 %v1194, %v1254
      %v1280 = vmul.f32 %v1195, %v1258
      %v1281 = vmul.f32 %v1196, %v1258
      %v1282 = vmul.f32 %v1197, %v1258
      %v1283 = vmul.f32 %v1198, %v1258
      %v1284 = vmul.f32 %v1199, %v1262
      %v1285 = vmul.f32 %v1200, %v1262
      %v1286 = vmul.f32 %v1201, %v1262
      %v1287 = vmul.f32 %v1202, %v1262
      %v1288 = vsel %vm647, %v1268, 0.0
      %1289 = vadd.xlane.f32.xlu0 %v1288
      %v1290 = vpop.xlane.xlu0 %1289
      %v1291 = vsel %vm647, %v1269, 0.0
      %1292 = vadd.xlane.f32.xlu0 %v1291
      %v1293 = vpop.xlane.xlu0 %1292
      %v1294 = vsel %vm647, %v1270, 0.0
      %1295 = vadd.xlane.f32.xlu0 %v1294
      %v1296 = vpop.xlane.xlu0 %1295
      %v1297 = vsel %vm647, %v1271, 0.0
      %1298 = vadd.xlane.f32.xlu0 %v1297
      %v1299 = vpop.xlane.xlu0 %1298
      %v1300 = vsel %vm647, %v1272, 0.0
      %1301 = vadd.xlane.f32.xlu0 %v1300
      %v1302 = vpop.xlane.xlu0 %1301
      %v1303 = vsel %vm647, %v1273, 0.0
      %1304 = vadd.xlane.f32.xlu0 %v1303
      %v1305 = vpop.xlane.xlu0 %1304
      %v1306 = vsel %vm647, %v1274, 0.0
      %1307 = vadd.xlane.f32.xlu0 %v1306
      %v1308 = vpop.xlane.xlu0 %1307
      %v1309 = vsel %vm647, %v1275, 0.0
      %1310 = vadd.xlane.f32.xlu0 %v1309
      %v1311 = vpop.xlane.xlu0 %1310
      %v1312 = vsel %vm647, %v1276, 0.0
      %1313 = vadd.xlane.f32.xlu0 %v1312
      %v1314 = vpop.xlane.xlu0 %1313
      %v1315 = vsel %vm647, %v1277, 0.0
      %1316 = vadd.xlane.f32.xlu0 %v1315
      %v1317 = vpop.xlane.xlu0 %1316
      %v1318 = vsel %vm647, %v1278, 0.0
      %1319 = vadd.xlane.f32.xlu0 %v1318
      %v1320 = vpop.xlane.xlu0 %1319
      %v1321 = vsel %vm647, %v1279, 0.0
      %1322 = vadd.xlane.f32.xlu0 %v1321
      %v1323 = vpop.xlane.xlu0 %1322
      %v1324 = vsel %vm647, %v1280, 0.0
      %1325 = vadd.xlane.f32.xlu0 %v1324
      %v1326 = vpop.xlane.xlu0 %1325
      %v1327 = vsel %vm647, %v1281, 0.0
      %1328 = vadd.xlane.f32.xlu0 %v1327
      %v1329 = vpop.xlane.xlu0 %1328
      %v1330 = vsel %vm647, %v1282, 0.0
      %1331 = vadd.xlane.f32.xlu0 %v1330
      %v1332 = vpop.xlane.xlu0 %1331
      %v1333 = vsel %vm647, %v1283, 0.0
      %1334 = vadd.xlane.f32.xlu0 %v1333
      %v1335 = vpop.xlane.xlu0 %1334
      %v1336 = vsel %vm647, %v1284, 0.0
      %1337 = vadd.xlane.f32.xlu0 %v1336
      %v1338 = vpop.xlane.xlu0 %1337
      %v1339 = vsel %vm647, %v1285, 0.0
      %1340 = vadd.xlane.f32.xlu0 %v1339
      %v1341 = vpop.xlane.xlu0 %1340
      %v1342 = vsel %vm647, %v1286, 0.0
      %1343 = vadd.xlane.f32.xlu0 %v1342
      %v1344 = vpop.xlane.xlu0 %1343
      %v1345 = vsel %vm647, %v1287, 0.0
      %1346 = vadd.xlane.f32.xlu0 %v1345
      %v1347 = vpop.xlane.xlu0 %1346
      %v1348 = vadd.f32 %v1125, %v1290
      %v1349 = vadd.f32 %v1128, %v1293
      %v1350 = vadd.f32 %v1131, %v1296
      %v1351 = vadd.f32 %v1134, %v1299
      %v1352 = vadd.f32 %v1137, %v1302
      %v1353 = vadd.f32 %v1140, %v1305
      %v1354 = vadd.f32 %v1143, %v1308
      %v1355 = vadd.f32 %v1146, %v1311
      %v1356 = vadd.f32 %v1149, %v1314
      %v1357 = vadd.f32 %v1152, %v1317
      %v1358 = vadd.f32 %v1155, %v1320
      %v1359 = vadd.f32 %v1158, %v1323
      %v1360 = vadd.f32 %v1161, %v1326
      %v1361 = vadd.f32 %v1164, %v1329
      %v1362 = vadd.f32 %v1167, %v1332
      %v1363 = vadd.f32 %v1170, %v1335
      %v1364 = vadd.f32 %v1173, %v1338
      %v1365 = vadd.f32 %v1176, %v1341
      %v1366 = vadd.f32 %v1179, %v1344
      %v1367 = vadd.f32 %v1182, %v1347
      %v1368 = vld [vmem:[%s7] sm:$0x1f]
      %v1370 = vlaneseq
      %v1371 = vshrl.u32 %v1370, 7
      %v1372 = vsub.s32 0, %v1371
      %v1373 = vrot.slane %v1368, %v1372
      %1375 = vbcast.lane.b32.xlu0 %v1373, 256
      %v1376 = vpop.permute.xlu0 %1375
      %s1378 = sor.u32 256, 8
      %1379 = vbcast.lane.b32.xlu0 %v1373, %s1378
      %v1380 = vpop.permute.xlu0 %1379
      %s1382 = sor.u32 256, 16
      %1383 = vbcast.lane.b32.xlu0 %v1373, %s1382
      %v1384 = vpop.permute.xlu0 %1383
      %s1386 = sor.u32 256, 24
      %1387 = vbcast.lane.b32.xlu0 %v1373, %s1386
      %v1388 = vpop.permute.xlu0 %1387
      %v1389 = vlaneseq
      %v1390 = vshrl.u32 %v1389, 7
      %v1391 = vsub.s32 1, %v1390
      %v1392 = vrot.slane %v1368, %v1391
      %1394 = vbcast.lane.b32.xlu0 %v1392, 256
      %v1395 = vpop.permute.xlu0 %1394
      %s1397 = sor.u32 256, 8
      %1398 = vbcast.lane.b32.xlu0 %v1392, %s1397
      %v1399 = vpop.permute.xlu0 %1398
      %s1401 = sor.u32 256, 16
      %1402 = vbcast.lane.b32.xlu0 %v1392, %s1401
      %v1403 = vpop.permute.xlu0 %1402
      %s1405 = sor.u32 256, 24
      %1406 = vbcast.lane.b32.xlu0 %v1392, %s1405
      %v1407 = vpop.permute.xlu0 %1406
      %v1408 = vlaneseq
      %v1409 = vshrl.u32 %v1408, 7
      %v1410 = vsub.s32 2, %v1409
      %v1411 = vrot.slane %v1368, %v1410
      %1413 = vbcast.lane.b32.xlu0 %v1411, 256
      %v1414 = vpop.permute.xlu0 %1413
      %s1416 = sor.u32 256, 8
      %1417 = vbcast.lane.b32.xlu0 %v1411, %s1416
      %v1418 = vpop.permute.xlu0 %1417
      %s1420 = sor.u32 256, 16
      %1421 = vbcast.lane.b32.xlu0 %v1411, %s1420
      %v1422 = vpop.permute.xlu0 %1421
      %s1424 = sor.u32 256, 24
      %1425 = vbcast.lane.b32.xlu0 %v1411, %s1424
      %v1426 = vpop.permute.xlu0 %1425
      %v1427 = vlaneseq
      %v1428 = vshrl.u32 %v1427, 7
      %v1429 = vsub.s32 3, %v1428
      %v1430 = vrot.slane %v1368, %v1429
      %1432 = vbcast.lane.b32.xlu0 %v1430, 256
      %v1433 = vpop.permute.xlu0 %1432
      %s1435 = sor.u32 256, 8
      %1436 = vbcast.lane.b32.xlu0 %v1430, %s1435
      %v1437 = vpop.permute.xlu0 %1436
      %s1439 = sor.u32 256, 16
      %1440 = vbcast.lane.b32.xlu0 %v1430, %s1439
      %v1441 = vpop.permute.xlu0 %1440
      %s1443 = sor.u32 256, 24
      %1444 = vbcast.lane.b32.xlu0 %v1430, %s1443
      %v1445 = vpop.permute.xlu0 %1444
      %v1446 = vlaneseq
      %v1447 = vshrl.u32 %v1446, 7
      %v1448 = vsub.s32 4, %v1447
      %v1449 = vrot.slane %v1368, %v1448
      %1451 = vbcast.lane.b32.xlu0 %v1449, 256
      %v1452 = vpop.permute.xlu0 %1451
      %s1454 = sor.u32 256, 8
      %1455 = vbcast.lane.b32.xlu0 %v1449, %s1454
      %v1456 = vpop.permute.xlu0 %1455
      %s1458 = sor.u32 256, 16
      %1459 = vbcast.lane.b32.xlu0 %v1449, %s1458
      %v1460 = vpop.permute.xlu0 %1459
      %s1462 = sor.u32 256, 24
      %1463 = vbcast.lane.b32.xlu0 %v1449, %s1462
      %v1464 = vpop.permute.xlu0 %1463
      %v1485 = vadd.f32 %v1348, %v1376
      %v1486 = vadd.f32 %v1349, %v1380
      %v1487 = vadd.f32 %v1350, %v1384
      %v1488 = vadd.f32 %v1351, %v1388
      %v1489 = vadd.f32 %v1352, %v1395
      %v1490 = vadd.f32 %v1353, %v1399
      %v1491 = vadd.f32 %v1354, %v1403
      %v1492 = vadd.f32 %v1355, %v1407
      %v1493 = vadd.f32 %v1356, %v1414
      %v1494 = vadd.f32 %v1357, %v1418
      %v1495 = vadd.f32 %v1358, %v1422
      %v1496 = vadd.f32 %v1359, %v1426
      %v1497 = vadd.f32 %v1360, %v1433
      %v1498 = vadd.f32 %v1361, %v1437
      %v1499 = vadd.f32 %v1362, %v1441
      %v1500 = vadd.f32 %v1363, %v1445
      %v1501 = vadd.f32 %v1364, %v1452
      %v1502 = vadd.f32 %v1365, %v1456
      %v1503 = vadd.f32 %v1366, %v1460
      %v1504 = vadd.f32 %v1367, %v1464
      %v1505 = vld [vmem:[%s8] sm:$0x1f]
      %v1506 = vmul.f32 %v1505, %v1015
      %vm1507 = vcmask 258048
      %v1508 = vsel %vm1507, %v1506, 0.0
      %1509 = vadd.xlane.f32.xlu0 %v1508
      %v1510 = vpop.xlane.xlu0 %1509
      %v1511 = vld [vmem:[%s9] sm:$0x1f]
      %v1512 = vadd.f32 %v1510, %v1511
      %v1513 = vpack.c.bf16 %v1486, %v1485
      %v1514 = vpack.c.bf16 %v1488, %v1487
      %v1515 = vpack.c.bf16 %v1490, %v1489
      %v1516 = vpack.c.bf16 %v1492, %v1491
      %v1517 = vpack.c.bf16 %v1494, %v1493
      %v1518 = vpack.c.bf16 %v1496, %v1495
      %v1519 = vpack.c.bf16 %v1498, %v1497
      %v1520 = vpack.c.bf16 %v1500, %v1499
      %v1521 = vpack.c.bf16 %v1502, %v1501
      %v1522 = vpack.c.bf16 %v1504, %v1503
      %1524 = vset.pattern.permute.xlu0 0
      %1525 = vperm.xlu0 %1524, %v1512
      %v1526 = vpop.permute.xlu0 %1525
      %v1538 = vunpack.c.l.b16 %v1513
      %v1539 = vunpack.c.h.b16 %v1513
      %v1540 = vunpack.c.l.b16 %v1514
      %v1541 = vunpack.c.h.b16 %v1514
      %v1542 = vunpack.c.l.b16 %v1515
      %v1543 = vunpack.c.h.b16 %v1515
      %v1544 = vunpack.c.l.b16 %v1516
      %v1545 = vunpack.c.h.b16 %v1516
      %v1546 = vunpack.c.l.b16 %v1517
      %v1547 = vunpack.c.h.b16 %v1517
      %v1548 = vunpack.c.l.b16 %v1518
      %v1549 = vunpack.c.h.b16 %v1518
      %v1550 = vunpack.c.l.b16 %v1519
      %v1551 = vunpack.c.h.b16 %v1519
      %v1552 = vunpack.c.l.b16 %v1520
      %v1553 = vunpack.c.h.b16 %v1520
      %v1554 = vunpack.c.l.b16 %v1521
      %v1555 = vunpack.c.h.b16 %v1521
      %v1556 = vunpack.c.l.b16 %v1522
      %v1557 = vunpack.c.h.b16 %v1522
      %1558 = vset.pattern.permute.xlu0 0
      %1559 = vperm.xlu0 %1558, %v1538
      %v1560 = vpop.permute.xlu0 %1559
      %1561 = vset.pattern.permute.xlu0 0
      %1562 = vperm.xlu0 %1561, %v1539
      %v1563 = vpop.permute.xlu0 %1562
      %1564 = vset.pattern.permute.xlu0 0
      %1565 = vperm.xlu0 %1564, %v1540
      %v1566 = vpop.permute.xlu0 %1565
      %1567 = vset.pattern.permute.xlu0 0
      %1568 = vperm.xlu0 %1567, %v1541
      %v1569 = vpop.permute.xlu0 %1568
      %1570 = vset.pattern.permute.xlu0 0
      %1571 = vperm.xlu0 %1570, %v1542
      %v1572 = vpop.permute.xlu0 %1571
      %1573 = vset.pattern.permute.xlu0 0
      %1574 = vperm.xlu0 %1573, %v1543
      %v1575 = vpop.permute.xlu0 %1574
      %1576 = vset.pattern.permute.xlu0 0
      %1577 = vperm.xlu0 %1576, %v1544
      %v1578 = vpop.permute.xlu0 %1577
      %1579 = vset.pattern.permute.xlu0 0
      %1580 = vperm.xlu0 %1579, %v1545
      %v1581 = vpop.permute.xlu0 %1580
      %1582 = vset.pattern.permute.xlu0 0
      %1583 = vperm.xlu0 %1582, %v1546
      %v1584 = vpop.permute.xlu0 %1583
      %1585 = vset.pattern.permute.xlu0 0
      %1586 = vperm.xlu0 %1585, %v1547
      %v1587 = vpop.permute.xlu0 %1586
      %1588 = vset.pattern.permute.xlu0 0
      %1589 = vperm.xlu0 %1588, %v1548
      %v1590 = vpop.permute.xlu0 %1589
      %1591 = vset.pattern.permute.xlu0 0
      %1592 = vperm.xlu0 %1591, %v1549
      %v1593 = vpop.permute.xlu0 %1592
      %1594 = vset.pattern.permute.xlu0 0
      %1595 = vperm.xlu0 %1594, %v1550
      %v1596 = vpop.permute.xlu0 %1595
      %1597 = vset.pattern.permute.xlu0 0
      %1598 = vperm.xlu0 %1597, %v1551
      %v1599 = vpop.permute.xlu0 %1598
      %1600 = vset.pattern.permute.xlu0 0
      %1601 = vperm.xlu0 %1600, %v1552
      %v1602 = vpop.permute.xlu0 %1601
      %1603 = vset.pattern.permute.xlu0 0
      %1604 = vperm.xlu0 %1603, %v1553
      %v1605 = vpop.permute.xlu0 %1604
      %1606 = vset.pattern.permute.xlu0 0
      %1607 = vperm.xlu0 %1606, %v1554
      %v1608 = vpop.permute.xlu0 %1607
      %1609 = vset.pattern.permute.xlu0 0
      %1610 = vperm.xlu0 %1609, %v1555
      %v1611 = vpop.permute.xlu0 %1610
      %1612 = vset.pattern.permute.xlu0 0
      %1613 = vperm.xlu0 %1612, %v1556
      %v1614 = vpop.permute.xlu0 %1613
      %1615 = vset.pattern.permute.xlu0 0
      %1616 = vperm.xlu0 %1615, %v1557
      %v1617 = vpop.permute.xlu0 %1616
      %v1618 = vlaneseq
      %v1619 = vand.u32 %v1618, 127
      %v1620 = vlaneseq
      %v1621 = vshrl.u32 %v1620, 7
      %v1622 = vsub.s32 %v1619, %v1621
      %v1623 = vrot.slane %v1560, %v1622
      %v1624 = vadd.s32 %v1619, 4294967288
      %v1625 = vlaneseq
      %v1626 = vshrl.u32 %v1625, 7
      %v1627 = vsub.s32 %v1624, %v1626
      %v1628 = vrot.slane %v1563, %v1627
      %vm1629 = vcmask 130112
      %v1630 = vsel %vm1629, %v1628, %v1623
      %v1631 = vadd.s32 %v1619, 4294967280
      %v1632 = vlaneseq
      %v1633 = vshrl.u32 %v1632, 7
      %v1634 = vsub.s32 %v1631, %v1633
      %v1635 = vrot.slane %v1566, %v1634
      %vm1636 = vcmask 195712
      %v1637 = vsel %vm1636, %v1635, %v1630
      %v1638 = vadd.s32 %v1619, 4294967272
      %v1639 = vlaneseq
      %v1640 = vshrl.u32 %v1639, 7
      %v1641 = vsub.s32 %v1638, %v1640
      %v1642 = vrot.slane %v1569, %v1641
      %vm1643 = vcmask 261312
      %v1644 = vsel %vm1643, %v1642, %v1637
      %v1645 = vlaneseq
      %v1646 = vshrl.u32 %v1645, 7
      %v1647 = vsub.s32 %v1619, %v1646
      %v1648 = vrot.slane %v1572, %v1647
      %v1649 = vlaneseq
      %v1650 = vshrl.u32 %v1649, 7
      %v1651 = vsub.s32 %v1624, %v1650
      %v1652 = vrot.slane %v1575, %v1651
      %v1653 = vsel %vm1629, %v1652, %v1648
      %v1654 = vlaneseq
      %v1655 = vshrl.u32 %v1654, 7
      %v1656 = vsub.s32 %v1631, %v1655
      %v1657 = vrot.slane %v1578, %v1656
      %v1658 = vsel %vm1636, %v1657, %v1653
      %v1659 = vlaneseq
      %v1660 = vshrl.u32 %v1659, 7
      %v1661 = vsub.s32 %v1638, %v1660
      %v1662 = vrot.slane %v1581, %v1661
      %v1663 = vsel %vm1643, %v1662, %v1658
      %v1664 = vlaneseq
      %v1665 = vshrl.u32 %v1664, 7
      %v1666 = vsub.s32 %v1619, %v1665
      %v1667 = vrot.slane %v1584, %v1666
      %v1668 = vlaneseq
      %v1669 = vshrl.u32 %v1668, 7
      %v1670 = vsub.s32 %v1624, %v1669
      %v1671 = vrot.slane %v1587, %v1670
      %v1672 = vsel %vm1629, %v1671, %v1667
      %v1673 = vlaneseq
      %v1674 = vshrl.u32 %v1673, 7
      %v1675 = vsub.s32 %v1631, %v1674
      %v1676 = vrot.slane %v1590, %v1675
      %v1677 = vsel %vm1636, %v1676, %v1672
      %v1678 = vlaneseq
      %v1679 = vshrl.u32 %v1678, 7
      %v1680 = vsub.s32 %v1638, %v1679
      %v1681 = vrot.slane %v1593, %v1680
      %v1682 = vsel %vm1643, %v1681, %v1677
      %v1683 = vlaneseq
      %v1684 = vshrl.u32 %v1683, 7
      %v1685 = vsub.s32 %v1619, %v1684
      %v1686 = vrot.slane %v1596, %v1685
      %v1687 = vlaneseq
      %v1688 = vshrl.u32 %v1687, 7
      %v1689 = vsub.s32 %v1624, %v1688
      %v1690 = vrot.slane %v1599, %v1689
      %v1691 = vsel %vm1629, %v1690, %v1686
      %v1692 = vlaneseq
      %v1693 = vshrl.u32 %v1692, 7
      %v1694 = vsub.s32 %v1631, %v1693
      %v1695 = vrot.slane %v1602, %v1694
      %v1696 = vsel %vm1636, %v1695, %v1691
      %v1697 = vlaneseq
      %v1698 = vshrl.u32 %v1697, 7
      %v1699 = vsub.s32 %v1638, %v1698
      %v1700 = vrot.slane %v1605, %v1699
      %v1701 = vsel %vm1643, %v1700, %v1696
      %v1702 = vlaneseq
      %v1703 = vshrl.u32 %v1702, 7
      %v1704 = vsub.s32 %v1619, %v1703
      %v1705 = vrot.slane %v1608, %v1704
      %v1706 = vlaneseq
      %v1707 = vshrl.u32 %v1706, 7
      %v1708 = vsub.s32 %v1624, %v1707
      %v1709 = vrot.slane %v1611, %v1708
      %v1710 = vsel %vm1629, %v1709, %v1705
      %v1711 = vlaneseq
      %v1712 = vshrl.u32 %v1711, 7
      %v1713 = vsub.s32 %v1631, %v1712
      %v1714 = vrot.slane %v1614, %v1713
      %v1715 = vsel %vm1636, %v1714, %v1710
      %v1716 = vlaneseq
      %v1717 = vshrl.u32 %v1716, 7
      %v1718 = vsub.s32 %v1638, %v1717
      %v1719 = vrot.slane %v1617, %v1718
      %v1720 = vsel %vm1643, %v1719, %v1715
      %vm1721 = vcmask 1041409
      %v1722 = vsel %vm1721, %v1663, %v1644
      %vm1723 = vcmask 1042434
      %v1724 = vsel %vm1723, %v1682, %v1722
      %vm1725 = vcmask 1043459
      %v1726 = vsel %vm1725, %v1701, %v1724
      %vm1727 = vcmask 1044484
      %v1728 = vsel %vm1727, %v1720, %v1726
      %v1729 = vpack.c.b16 %v1728, %v1728
      %v1731 = vsel %vm647, %v1729, 0
      %1733 = vmatprep.subr.bf16.mxu0 0
      %1734 = vmatpush1.bf16.msra.mxu0 0
      %1735 = vmatprep.subr.bf16.mxu0 0
      %1736 = vmatpush1.bf16.msra.mxu0 0
      %1737 = vmatprep.subr.bf16.mxu0 0
      %1738 = vmatpush1.bf16.msra.mxu0 0
      %1739 = vmatprep.subr.bf16.mxu0 0
      %1740 = vmatpush1.bf16.msra.mxu0 0
      %1741 = vmatprep.subr.bf16.mxu0 0
      %1742 = vmatpush1.bf16.msra.mxu0 0
      %1743 = vmatprep.subr.bf16.mxu0 0
      %1744 = vmatpush1.bf16.msra.mxu0 0
      %1745 = vmatprep.subr.bf16.mxu0 %v639
      %1746 = vmatpush1.bf16.msra.mxu0 %v638
      %1747 = vmatprep.subr.bf16.mxu0 %v637
      %1748 = vmatpush1.bf16.msra.mxu0 %v636
      %1749 = vmatprep.subr.bf16.mxu0 0
      %1750 = vmatpush2.bf16.msra.mxu0 0
      %1751 = vmatprep.subr.bf16.mxu0 0
      %1752 = vmatpush2.bf16.msra.mxu0 0
      %1753 = vmatprep.subr.bf16.mxu0 0
      %1754 = vmatpush2.bf16.msra.mxu0 0
      %1755 = vmatprep.subr.bf16.mxu0 0
      %1756 = vmatpush2.bf16.msra.mxu0 0
      %1757 = vmatprep.subr.bf16.mxu0 0
      %1758 = vmatpush2.bf16.msra.mxu0 0
      %1759 = vmatprep.subr.bf16.mxu0 0
      %1760 = vmatpush2.bf16.msra.mxu0 0
      %1761 = vmatprep.subr.bf16.mxu0 0
      %1762 = vmatpush2.bf16.msra.mxu0 0
      %1763 = vmatprep.subr.bf16.mxu0 0
      %1764 = vmatpush2.bf16.msra.mxu0 0
      %1765 = vmatprep.mubr.bf16.mxu0 0
      %1766 = vmatmul.mubr.bf16.gmra.mxu0 %v1731
      %v1767 = vpop.f32.mrf.mxu0
      %v1768 = vadd.f32 %v1526, %v1767
      %v1769 = vpop.f32.mrf.mxu0
      %v1770 = vadd.f32 %v1526, %v1769
      %v1771 = vpop.f32.mrf.mxu0
      %v1772 = vpop.f32.mrf.mxu0
      %1773 = vdwg.mxu0
      %v1774 = vpack.c.bf16 %v1768, %v1768
      %v1775 = vpack.c.bf16 %v1770, %v1770
      %v1778 = vunpack.c.l.b16 %v1774
      %v1779 = vunpack.c.l.b16 %v1775
      %v1780 = vpack.c.b16 %v1779, %v1778
      %v1782 = vld [vmem:[%s480] sm:$0x77]
      %v1783 = vsel %vm706, %v1780, %v1782
      %1784 = vst [vmem:[%s480] sm:$0x77] %v1783
      %p1785 = scmp.lt.s32.totalorder %s26, 1
      %s1786 = scalar_select %p1785, %s26, 1
      %s1787 = smul.addr %s1786, 2
      %s1788 = smul.addr %s1787, 4
      %s1789 = scalar_lea.vmem %s13, %s1788
      %p1790 = scmp.lt.s32.totalorder %s26, 1
      %s1791 = scalar_select %p1790, %s26, 1
      %s1792 = smul.addr %s1791, 2
      %s1793 = smul.addr %s1792, 4
      %s1794 = scalar_lea.vmem %s14, %s1793
      // Predicated region
      $region73: #{cond_head_forward.1} parent=71 // pred_check
        %p1795 = pneg %p322
      $region74: #{cond_head_forward.1} parent=71 // pred_check_branch
        %1797 = sbr.rel (%p1795) target = $region76
      $region75: #{cond_head_forward.1} parent=71 // pred_region
        _
      $region76: #{cond_head_forward.1} parent=71 // pred_fallthru
        _
      // Predicated region
      $region77: #{cond_head_forward.1} parent=71 // pred_check
        %p1798 = pneg %p348
      $region78: #{cond_head_forward.1} parent=71 // pred_check_branch
        %1800 = sbr.rel (%p1798) target = $region80
      $region79: #{cond_head_forward.1} parent=71 // pred_region
        _
      $region80: #{cond_head_forward.1} parent=71 // pred_fallthru
        _
    $region72: #{cond_head_forward.1} parent=5 // pred_fallthru
      _
    %p1801 = scmp.le.s32.totalorder 2, %s21
    // Predicated region
    $region81: #{cond_head_forward.1} parent=5 // pred_check
      %p1802 = pneg %p1801
    $region82: #{cond_head_forward.1} parent=5 // pred_check_branch
      %1804 = sbr.rel (%p1802) target = $region84
    $region83: #{cond_head_forward.1} parent=5 // pred_region
      %s1805 = ssub.s32 %s21, 2
      // Predicated region
      $region85: #{cond_head_forward.1} parent=83 // pred_check
        %p1806 = pneg %p328
      $region86: #{cond_head_forward.1} parent=83 // pred_check_branch
        %1808 = sbr.rel (%p1806) target = $region88
      $region87: #{cond_head_forward.1} parent=83 // pred_region
        %p1809 = scmp.lt.s32.totalorder %s27, 1
        %s1810 = scalar_select %p1809, %s27, 1
        %s1811 = smul.addr %s1810, 2
        %s1812 = smul.addr %s1811, 4
        %s1813 = scalar_lea.vmem %s13, %s1812
      $region88: #{cond_head_forward.1} parent=83 // pred_fallthru
        _
      // Predicated region
      $region89: #{cond_head_forward.1} parent=83 // pred_check
        %p1814 = pneg %p354
      $region90: #{cond_head_forward.1} parent=83 // pred_check_branch
        %1816 = sbr.rel (%p1814) target = $region92
      $region91: #{cond_head_forward.1} parent=83 // pred_region
        %p1817 = scmp.lt.s32.totalorder %s27, 1
        %s1818 = scalar_select %p1817, %s27, 1
        %s1819 = smul.addr %s1818, 2
        %s1820 = smul.addr %s1819, 4
        %s1821 = scalar_lea.vmem %s14, %s1820
      $region92: #{cond_head_forward.1} parent=83 // pred_fallthru
        _
    $region84: #{cond_head_forward.1} parent=5 // pred_fallthru
      _
  $region6: #{cond_head_forward.1} parent=0 // loop_footer
    %s25 = sadd.s32 1, %s21
  $region7: #{cond_head_forward.1} parent=0 // loop_footer_branch
    %20 = sbr.rel target = $region3
  $region8: #{cond_head_forward.1} parent=0 // loop_exit
    _

</llo_original>
